<compile_context>
chip_gen: v6e
topology: v6e:2x2x1
jax: 0.10.0
libtpu: 0.0.40
codegen_flags: <defaults>
</compile_context>

<pallas_src>
import functools

import jax
import jax.numpy as jnp
from jax import lax
from jax.experimental import pallas as pl
from jax.experimental.pallas import tpu as pltpu

EPS = 1e-6          # module-level EPS in the reference
BN_EPS = 1e-5       # torch BatchNorm default eps


def _vmem_limit_bytes():
    """Scoped-VMEM limit: ~half of physical (64 MiB on v5e/v6e, 32 MiB on v7x)."""
    try:
        cap = int(pltpu.get_tpu_info().vmem_capacity_bytes)
    except Exception:
        cap = 64 * 1024 * 1024      # conservative (v7x per-core physical VMEM)
    return max(16 * 1024 * 1024, min(cap // 2, 64 * 1024 * 1024))


def _divisor_leq(n, cap, prefer_even_quotient=False):
    """Largest divisor of n that is <= cap (optionally preferring even n/d)."""
    cap = max(1, min(n, cap))
    best = 0
    for d in range(cap, 0, -1):
        if n % d == 0:
            if not prefer_even_quotient:
                return d
            if (n // d) % 2 == 0:
                return d
            if best == 0:
                best = d
    return best if best else 1


# ---------------------------------------------------------------------------
# Fused single-pass kernel: stats + apply on a resident (B, c_tile, 3, N) slab.
# ---------------------------------------------------------------------------
def _fused_kernel(x_ref, g_ref, b_ref, o_ref, *, bn_eps, inv_m):
    """x_ref/o_ref: (B, ct, 3, N);  g_ref/b_ref: (1, ct, 1, 1)."""
    x = x_ref[...].astype(jnp.float32)
    normsq = jnp.sum(x * x, axis=2, keepdims=True)            # (B, ct, 1, N)
    norm = jnp.sqrt(normsq) + EPS

    # Per-channel batch statistics over (B, N): lane reduce, then add over B.
    s1 = jnp.sum(jnp.sum(norm, axis=3, keepdims=True), axis=0, keepdims=True)
    mean = s1 * inv_m                                          # (1, ct, 1, 1)
    diff = norm - mean
    s2 = jnp.sum(jnp.sum(diff * diff, axis=3, keepdims=True), axis=0, keepdims=True)
    var = s2 * inv_m                                           # biased (torch BN train mode)
    inv_std = lax.rsqrt(var + bn_eps)                          # (1, ct, 1, 1)

    gamma = g_ref[...].astype(jnp.float32)
    beta = b_ref[...].astype(jnp.float32)
    a = gamma * inv_std
    b = beta - gamma * mean * inv_std
    # out = x / norm * norm_bn  ==  x * (a + b / norm).  Exact reciprocal: the
    # approximate EUP rcp was the source of the previous 9e-3 error.
    scale = a + b * pl.reciprocal(norm, approx=False)          # (B, ct, 1, N)
    o_ref[...] = (x * scale).astype(o_ref.dtype)


# ---------------------------------------------------------------------------
# Two-pass fallback (channel slab too big for VMEM).
# ---------------------------------------------------------------------------
def _stats_kernel(x_ref, sums_ref):
    """x_ref: (1, ct, 3, nt); sums_ref: (2, ct, 1, 1) resident accumulator."""
    @pl.when((pl.program_id(1) == 0) & (pl.program_id(2) == 0))
    def _():
        sums_ref[...] = jnp.zeros_like(sums_ref)

    x = x_ref[...].astype(jnp.float32)
    normsq = jnp.sum(x * x, axis=2, keepdims=True)             # (1, ct, 1, nt)
    norm = jnp.sqrt(normsq) + EPS
    sums_ref[0:1] += jnp.sum(norm, axis=3, keepdims=True)
    sums_ref[1:2] += jnp.sum(norm * norm, axis=3, keepdims=True)


def _apply_kernel(x_ref, ab_ref, o_ref):
    """x_ref/o_ref: (1, ct, 3, nt); ab_ref: (2, ct, 1, 1) = [a, b]."""
    x = x_ref[...].astype(jnp.float32)
    normsq = jnp.sum(x * x, axis=2, keepdims=True)
    norm = jnp.sqrt(normsq) + EPS
    a = ab_ref[0:1]
    b = ab_ref[1:2]
    scale = a + b * pl.reciprocal(norm, approx=False)          # (1, ct, 1, nt)
    o_ref[...] = (x * scale).astype(o_ref.dtype)


# ---------------------------------------------------------------------------
# Wrapper
# ---------------------------------------------------------------------------
def vn_batchnorm(x, gamma=None, beta=None, *, bn_eps=BN_EPS,
                 force_two_pass=False, c_tile=None, n_tile=None):
    """VNBatchNorm forward (training-mode batch statistics).

    x: [B, C, 3, *spatial]; trailing spatial dims are flattened into one point
    axis (free reshape).  Returns an array of the same shape/dtype as x.
    """
    assert x.ndim >= 3 and x.shape[2] == 3, "expected x of shape [B, C, 3, ...]"
    B, C = int(x.shape[0]), int(x.shape[1])
    N = 1
    for s in x.shape[3:]:
        N *= int(s)
    x4 = x.reshape(B, C, 3, N)

    if gamma is None:
        gamma = jnp.ones((C,), jnp.float32)
    if beta is None:
        beta = jnp.zeros((C,), jnp.float32)
    gamma = jnp.asarray(gamma, jnp.float32)
    beta = jnp.asarray(beta, jnp.float32)

    vmem_limit = _vmem_limit_bytes()

    # -------- fused single-pass path (1 read + 1 write of x over HBM) --------
    bytes_per_c = B * 8 * N * 4            # f32 working set per channel (3 -> 8 sublane pad)
    fused_budget = vmem_limit // 10        # headroom for in/out double-buffers + temps
    if (not force_two_pass) and bytes_per_c <= fused_budget:
        if c_tile is None:
            cap = max(1, fused_budget // bytes_per_c)
            if C > 1:
                cap = max(1, min(cap, C // 2))   # cb >= 2 so v7x megacore shards the grid
            ct = _divisor_leq(C, cap, prefer_even_quotient=True)
        else:
            ct = int(c_tile)
        assert C % ct == 0
        cb = C // ct

        x_spec = pl.BlockSpec((B, ct, 3, N), lambda ci: (0, ci, 0, 0))
        gb_spec = pl.BlockSpec((1, ct, 1, 1), lambda ci: (0, ci, 0, 0))
        kern = functools.partial(_fused_kernel, bn_eps=float(bn_eps),
                                 inv_m=1.0 / float(B * N))
        out = pl.pallas_call(
            kern,
            out_shape=jax.ShapeDtypeStruct((B, C, 3, N), x.dtype),
            grid_spec=pltpu.PrefetchScalarGridSpec(
                num_scalar_prefetch=0,
                grid=(cb,),
                in_specs=[x_spec, gb_spec, gb_spec],
                out_specs=x_spec),
            compiler_params=pltpu.CompilerParams(
                dimension_semantics=("parallel",),
                vmem_limit_bytes=vmem_limit),
        )(x4, gamma.reshape(1, C, 1, 1), beta.reshape(1, C, 1, 1))
        return out.reshape(x.shape)

    # -------- two-pass fallback (channel slab does not fit VMEM) -------------
    block_budget = vmem_limit // 8
    if n_tile is None:
        if N % 128 == 0:
            n_tile = 128 * _divisor_leq(N // 128, 32)     # up to 4096 lanes
        else:
            n_tile = N   # full-extent lane dim (always legal, masked stores)
    if c_tile is None:
        cap = max(1, block_budget // (8 * n_tile * 4))
        if C > 1:
            cap = max(1, min(cap, C // 2))                # keep cb >= 2 for v7x
        c_tile = _divisor_leq(C, cap, prefer_even_quotient=True)
    assert N % n_tile == 0 and C % c_tile == 0
    cb, nb = C // c_tile, N // n_tile

    x_spec = pl.BlockSpec((1, c_tile, 3, n_tile), lambda ci, b, ni: (b, ci, 0, ni))
    perchan_spec = pl.BlockSpec((2, c_tile, 1, 1), lambda ci, b, ni: (0, ci, 0, 0))

    # pass 1: per-channel sum(norm), sum(norm^2), accumulated in a resident block
    sums = pl.pallas_call(
        _stats_kernel,
        out_shape=jax.ShapeDtypeStruct((2, C, 1, 1), jnp.float32),
        grid_spec=pltpu.PrefetchScalarGridSpec(
            num_scalar_prefetch=0,
            grid=(cb, B, nb),
            in_specs=[x_spec],
            out_specs=perchan_spec),
        compiler_params=pltpu.CompilerParams(
            dimension_semantics=("parallel", "arbitrary", "arbitrary"),
            vmem_limit_bytes=vmem_limit),
    )(x4)

    # tiny per-channel epilogue (C floats of XLA glue)
    m = float(B * N)
    mean = sums[0, :, 0, 0] / m
    var = jnp.maximum(sums[1, :, 0, 0] / m - mean * mean, 0.0)   # biased, torch BN train
    inv_std = lax.rsqrt(var + bn_eps)
    a = gamma * inv_std
    b = beta - gamma * mean * inv_std
    ab = jnp.stack([a, b], axis=0).reshape(2, C, 1, 1).astype(jnp.float32)

    # pass 2: apply per-(c, n) scale, fully parallel grid
    out = pl.pallas_call(
        _apply_kernel,
        out_shape=jax.ShapeDtypeStruct((B, C, 3, N), x.dtype),
        grid_spec=pltpu.PrefetchScalarGridSpec(
            num_scalar_prefetch=0,
            grid=(cb, B, nb),
            in_specs=[x_spec, perchan_spec],
            out_specs=x_spec),
        compiler_params=pltpu.CompilerParams(
            dimension_semantics=("parallel", "parallel", "parallel"),
            vmem_limit_bytes=vmem_limit),
    )(x4, ab)
    return out.reshape(x.shape)


def _vn_batchnorm_ref(x, gamma=None, beta=None, bn_eps=BN_EPS):
    """Pure-JAX reference of the VNBatchNorm forward (training-mode stats)."""
    norm = jnp.sqrt(jnp.sum(x * x, axis=2)) + EPS        # [B, C, *spatial]
    axes = (0,) + tuple(range(2, norm.ndim))
    mean = jnp.mean(norm, axis=axes, keepdims=True)
    var = jnp.mean((norm - mean) ** 2, axis=axes, keepdims=True)
    norm_bn = (norm - mean) / jnp.sqrt(var + bn_eps)
    if gamma is not None:
        shp = (1, -1) + (1,) * (norm.ndim - 2)
        norm_bn = norm_bn * gamma.reshape(shp) + beta.reshape(shp)
    return x / jnp.expand_dims(norm, 2) * jnp.expand_dims(norm_bn, 2)


if __name__ == "__main__":
    # Small shapes consistent with the module's [B, N_feat, 3, N_samples] layout.
    B, C, N = 2, 16, 256
    key = jax.random.PRNGKey(0)
    kx, kg, kb = jax.random.split(key, 3)
    x = jax.random.normal(kx, (B, C, 3, N), dtype=jnp.float32)
    gamma = 1.0 + 0.1 * jax.random.normal(kg, (C,), dtype=jnp.float32)
    beta = 0.1 * jax.random.normal(kb, (C,), dtype=jnp.float32)

    ref_default = _vn_batchnorm_ref(x)
    ref_affine = _vn_batchnorm_ref(x, gamma, beta)

    # Fused single-pass path (default): channel slab resident, grid over C tiles.
    out = jax.block_until_ready(vn_batchnorm(x))
    assert out.shape == x.shape and out.dtype == x.dtype
    assert jnp.allclose(out, ref_default, rtol=1e-3, atol=1e-3), \
        float(jnp.max(jnp.abs(out - ref_default)))

    # Fused path with explicit affine parameters.
    out_aff = jax.block_until_ready(vn_batchnorm(x, gamma, beta))
    assert jnp.allclose(out_aff, ref_affine, rtol=1e-3, atol=1e-3), \
        float(jnp.max(jnp.abs(out_aff - ref_affine)))

    # Two-pass fallback, forced with small tiles -> exercises cross-tile stat
    # accumulation (grid 4 x 2 x 2).
    out2 = jax.block_until_ready(
        vn_batchnorm(x, force_two_pass=True, c_tile=4, n_tile=128))
    assert jnp.allclose(out2, ref_default, rtol=1e-3, atol=1e-3), \
        float(jnp.max(jnp.abs(out2 - ref_default)))

    print("KERNEL_OK")
</pallas_src>

<mosaic_0001>
module attributes {stable_mosaic.version = 11 : i64} {
  func.func @_fused_kernel(%arg0: i32, %arg1: memref<2x8x3x256xf32, #tpu.memory_space<vmem>>, %arg2: memref<1x8x1x1xf32, #tpu.memory_space<vmem>>, %arg3: memref<1x8x1x1xf32, #tpu.memory_space<vmem>>, %arg4: memref<2x8x3x256xf32, #tpu.memory_space<vmem>>) attributes {dimension_semantics = [#tpu.dimension_semantics<parallel>], iteration_bounds = array<i64: 2>, scalar_prefetch = 0 : i64, scratch_operands = 0 : i64, tpu.core_type = #tpu.core_type<tc>, window_params = [{transform_indices = @transform_0, window_bounds = array<i64: 2, 8, 3, 256>}, {transform_indices = @transform_1, window_bounds = array<i64: 1, 8, 1, 1>}, {transform_indices = @transform_2, window_bounds = array<i64: 1, 8, 1, 1>}, {transform_indices = @transform_3, window_bounds = array<i64: 2, 8, 3, 256>}]} {
    %c0 = arith.constant 0 : index
    %c0_0 = arith.constant 0 : index
    %c0_1 = arith.constant 0 : index
    %c0_2 = arith.constant 0 : index
    %0 = vector.load %arg1[%c0, %c0_0, %c0_1, %c0_2] : memref<2x8x3x256xf32, #tpu.memory_space<vmem>>, vector<2x8x3x256xf32>
    %1 = arith.mulf %0, %0 : vector<2x8x3x256xf32>
    %cst = arith.constant dense<0.000000e+00> : vector<2x8x256xf32>
    %2 = vector.multi_reduction <add>, %1, %cst [2] : vector<2x8x3x256xf32> to vector<2x8x256xf32>
    %3 = vector.shape_cast %2 : vector<2x8x256xf32> to vector<2x8x1x256xf32>
    %4 = math.sqrt %3 : vector<2x8x1x256xf32>
    %cst_3 = arith.constant 9.99999997E-7 : f32
    %5 = vector.broadcast %cst_3 : f32 to vector<2x8x1x256xf32>
    %6 = arith.addf %4, %5 : vector<2x8x1x256xf32>
    %cst_4 = arith.constant dense<0.000000e+00> : vector<2x8x1xf32>
    %7 = vector.multi_reduction <add>, %6, %cst_4 [3] : vector<2x8x1x256xf32> to vector<2x8x1xf32>
    %8 = vector.shape_cast %7 : vector<2x8x1xf32> to vector<2x8x1x1xf32>
    %cst_5 = arith.constant dense<0.000000e+00> : vector<8x1x1xf32>
    %9 = vector.multi_reduction <add>, %8, %cst_5 [0] : vector<2x8x1x1xf32> to vector<8x1x1xf32>
    %10 = vector.shape_cast %9 : vector<8x1x1xf32> to vector<1x8x1x1xf32>
    %cst_6 = arith.constant 0.001953125 : f32
    %11 = vector.broadcast %cst_6 : f32 to vector<1x8x1x1xf32>
    %12 = arith.mulf %10, %11 : vector<1x8x1x1xf32>
    %13 = vector.broadcast %12 : vector<1x8x1x1xf32> to vector<2x8x1x256xf32>
    %14 = arith.subf %6, %13 : vector<2x8x1x256xf32>
    %15 = arith.mulf %14, %14 : vector<2x8x1x256xf32>
    %cst_7 = arith.constant dense<0.000000e+00> : vector<2x8x1xf32>
    %16 = vector.multi_reduction <add>, %15, %cst_7 [3] : vector<2x8x1x256xf32> to vector<2x8x1xf32>
    %17 = vector.shape_cast %16 : vector<2x8x1xf32> to vector<2x8x1x1xf32>
    %cst_8 = arith.constant dense<0.000000e+00> : vector<8x1x1xf32>
    %18 = vector.multi_reduction <add>, %17, %cst_8 [0] : vector<2x8x1x1xf32> to vector<8x1x1xf32>
    %19 = vector.shape_cast %18 : vector<8x1x1xf32> to vector<1x8x1x1xf32>
    %cst_9 = arith.constant 0.001953125 : f32
    %20 = vector.broadcast %cst_9 : f32 to vector<1x8x1x1xf32>
    %21 = arith.mulf %19, %20 : vector<1x8x1x1xf32>
    %cst_10 = arith.constant 9.99999974E-6 : f32
    %22 = vector.broadcast %cst_10 : f32 to vector<1x8x1x1xf32>
    %23 = arith.addf %21, %22 : vector<1x8x1x1xf32>
    %24 = math.rsqrt %23 : vector<1x8x1x1xf32>
    %c0_11 = arith.constant 0 : index
    %c0_12 = arith.constant 0 : index
    %c0_13 = arith.constant 0 : index
    %c0_14 = arith.constant 0 : index
    %25 = vector.load %arg2[%c0_11, %c0_12, %c0_13, %c0_14] : memref<1x8x1x1xf32, #tpu.memory_space<vmem>>, vector<1x8x1x1xf32>
    %c0_15 = arith.constant 0 : index
    %c0_16 = arith.constant 0 : index
    %c0_17 = arith.constant 0 : index
    %c0_18 = arith.constant 0 : index
    %26 = vector.load %arg3[%c0_15, %c0_16, %c0_17, %c0_18] : memref<1x8x1x1xf32, #tpu.memory_space<vmem>>, vector<1x8x1x1xf32>
    %27 = arith.mulf %25, %24 : vector<1x8x1x1xf32>
    %28 = arith.mulf %25, %12 : vector<1x8x1x1xf32>
    %29 = arith.mulf %28, %24 : vector<1x8x1x1xf32>
    %30 = arith.subf %26, %29 : vector<1x8x1x1xf32>
    %31 = tpu.reciprocal %6 : vector<2x8x1x256xf32> -> vector<2x8x1x256xf32>
    %32 = vector.broadcast %30 : vector<1x8x1x1xf32> to vector<2x8x1x256xf32>
    %33 = arith.mulf %32, %31 : vector<2x8x1x256xf32>
    %34 = vector.broadcast %27 : vector<1x8x1x1xf32> to vector<2x8x1x256xf32>
    %35 = arith.addf %34, %33 : vector<2x8x1x256xf32>
    %36 = vector.broadcast %35 : vector<2x8x1x256xf32> to vector<2x8x3x256xf32>
    %37 = arith.mulf %0, %36 : vector<2x8x3x256xf32>
    %c0_19 = arith.constant 0 : index
    %c0_20 = arith.constant 0 : index
    %c0_21 = arith.constant 0 : index
    %c0_22 = arith.constant 0 : index
    %38 = vector.load %arg4[%c0_19, %c0_20, %c0_21, %c0_22] : memref<2x8x3x256xf32, #tpu.memory_space<vmem>>, vector<2x8x3x256xf32>
    tpu.vector_store %arg4[%c0_19, %c0_20, %c0_21, %c0_22], %37 {strides = array<i32>} : memref<2x8x3x256xf32, #tpu.memory_space<vmem>>, vector<2x8x3x256xf32>,
    return
  }
  func.func @transform_0(%arg0: i32) -> (i32, i32, i32, i32) {
    %c0_i32 = arith.constant 0 : i32
    %c0_i32_0 = arith.constant 0 : i32
    %c0_i32_1 = arith.constant 0 : i32
    %c0_i32_2 = arith.constant 0 : i32
    return %c0_i32, %arg0, %c0_i32_0, %c0_i32_1 : i32, i32, i32, i32
  }
  func.func @transform_1(%arg0: i32) -> (i32, i32, i32, i32) {
    %c0_i32 = arith.constant 0 : i32
    %c0_i32_0 = arith.constant 0 : i32
    %c0_i32_1 = arith.constant 0 : i32
    %c0_i32_2 = arith.constant 0 : i32
    return %c0_i32, %arg0, %c0_i32_0, %c0_i32_1 : i32, i32, i32, i32
  }
  func.func @transform_2(%arg0: i32) -> (i32, i32, i32, i32) {
    %c0_i32 = arith.constant 0 : i32
    %c0_i32_0 = arith.constant 0 : i32
    %c0_i32_1 = arith.constant 0 : i32
    %c0_i32_2 = arith.constant 0 : i32
    return %c0_i32, %arg0, %c0_i32_0, %c0_i32_1 : i32, i32, i32, i32
  }
  func.func @transform_3(%arg0: i32) -> (i32, i32, i32, i32) {
    %c0_i32 = arith.constant 0 : i32
    %c0_i32_0 = arith.constant 0 : i32
    %c0_i32_1 = arith.constant 0 : i32
    %c0_i32_2 = arith.constant 0 : i32
    return %c0_i32, %arg0, %c0_i32_0, %c0_i32_1 : i32, i32, i32, i32
  }
}

</mosaic_0001>

<llo_original>
// kernel: tpu_custom_call.1
$region0: #{tpu_custom_call.1}
  #allocation0 [shape = 'u32[]', space=smem, size = 0x4, offset = 0x4, fixed_abs, tag = 'smem constant byte address 0x4 - core index']
  #allocation1 [shape = 'u32[144,128]{1,0:T(1,128)}', space=vmem, size = 0x12000, scoped, tag = 'internal scratch']
  %s0 = inlined_call_operand.vmem [shape: f32[2,16,3,256], index: 0, kind: input, shape index: {}]
  %s1 = inlined_call_operand.vmem [shape: f32[1,16,1,1], index: 1, kind: input, shape index: {}]
  %s2 = inlined_call_operand.vmem [shape: f32[1,16,1,1], index: 2, kind: input, shape index: {}]
  %s3 = inlined_call_operand.vmem [shape: f32[2,16,3,256], index: 3, kind: output, shape index: {}]
  %s4 = sld [smem:[#allocation0]]
  $region117: #{tpu_custom_call.1} parent=0
    _
  %s6 = ssub.s32 1, %s4
  %s7 = scalar_select 0, %s6, %s4
  $region1: #{tpu_custom_call.1} parent=0
    #allocation2 [shape = 'u8[131072]{0}', space=vmem, size = 0x20000, scoped, tag = 'input window, operand 0']
    #allocation3 [shape = 'u8[131072]{0}', space=vmem, size = 0x20000, scoped, tag = 'output window, operand 0']
    loop: start=0, step=1, limit=4
    $region2: #{tpu_custom_call.1} parent=1 // loop_pre_header
      _
    $region3: #{tpu_custom_call.1} parent=1 // loop_header
      %s9 = sphi 0, %s13
      %p10 = scmp.ge.s32.totalorder %s9, 4
      %s19 = sphi 0, %s21
      %s22 = sphi 0, %s19
      %s23 = sphi 0, %s22
      %s39 = sphi 0, %s23
      %s45 = sphi 0, %s47
      %s48 = sphi 0, %s45
      %s49 = sphi 0, %s48
      %s65 = sphi 0, %s49
      %s71 = sphi 0, %s73
      %s74 = sphi 0, %s71
      %s75 = sphi 0, %s74
      %s91 = sphi 0, %s75
      %s97 = sphi 0, %s99
      %s100 = sphi 0, %s97
      %s101 = sphi 0, %s100
      %s117 = sphi 0, %s101
    $region4: #{tpu_custom_call.1} parent=1 // loop_header_branch
      %12 = sbr.rel (%p10) target = $region8
    $region5: #{tpu_custom_call.1} parent=1 // loop_body
      %s14 = ssub.s32 %s9, 1
      %s15 = ssub.s32 %s9, 2
      %s16 = sadd.s32 %s9, 1
      %s17 = ssub.s32 %s9, %s16
      %p18 = scmp.eq.s32.totalorder %s17, 0
      %s20 = sadd.s32 %s19, 1
      %s21 = scalar_select %p18, %s19, %s20
      %p24 = pneg %p18
      %p25 = scmp.eq.s32.totalorder %s9, 1
      %p26 = por %p24, %p25
      %p27 = scmp.ne.s32.totalorder %s19, %s22
      %p28 = scmp.eq.s32.totalorder %s9, 0
      %p29 = por %p27, %p28
      %p30 = scmp.ne.s32.totalorder %s19, %s22
      %p31 = scmp.eq.s32.totalorder %s14, 1
      %p32 = por %p30, %p31
      %p33 = scmp.ne.s32.totalorder %s22, %s23
      %p34 = scmp.eq.s32.totalorder %s14, 0
      %p35 = por %p33, %p34
      %p36 = scmp.ne.s32.totalorder %s22, %s23
      %p37 = scmp.eq.s32.totalorder %s15, 1
      %p38 = por %p36, %p37
      %p40 = scmp.ne.s32.totalorder %s23, %s39
      %p41 = scmp.eq.s32.totalorder %s15, 0
      %p42 = por %p40, %p41
      %s43 = ssub.s32 %s9, %s16
      %p44 = scmp.eq.s32.totalorder %s43, 0
      %s46 = sadd.s32 %s45, 1
      %s47 = scalar_select %p44, %s45, %s46
      %p50 = pneg %p44
      %p51 = scmp.eq.s32.totalorder %s9, 1
      %p52 = por %p50, %p51
      %p53 = scmp.ne.s32.totalorder %s45, %s48
      %p54 = scmp.eq.s32.totalorder %s9, 0
      %p55 = por %p53, %p54
      %p56 = scmp.ne.s32.totalorder %s45, %s48
      %p57 = scmp.eq.s32.totalorder %s14, 1
      %p58 = por %p56, %p57
      %p59 = scmp.ne.s32.totalorder %s48, %s49
      %p60 = scmp.eq.s32.totalorder %s14, 0
      %p61 = por %p59, %p60
      %p62 = scmp.ne.s32.totalorder %s48, %s49
      %p63 = scmp.eq.s32.totalorder %s15, 1
      %p64 = por %p62, %p63
      %p66 = scmp.ne.s32.totalorder %s49, %s65
      %p67 = scmp.eq.s32.totalorder %s15, 0
      %p68 = por %p66, %p67
      %s69 = ssub.s32 %s9, %s16
      %p70 = scmp.eq.s32.totalorder %s69, 0
      %s72 = sadd.s32 %s71, 1
      %s73 = scalar_select %p70, %s71, %s72
      %p76 = pneg %p70
      %p77 = scmp.eq.s32.totalorder %s9, 1
      %p78 = por %p76, %p77
      %p79 = scmp.ne.s32.totalorder %s71, %s74
      %p80 = scmp.eq.s32.totalorder %s9, 0
      %p81 = por %p79, %p80
      %p82 = scmp.ne.s32.totalorder %s71, %s74
      %p83 = scmp.eq.s32.totalorder %s14, 1
      %p84 = por %p82, %p83
      %p85 = scmp.ne.s32.totalorder %s74, %s75
      %p86 = scmp.eq.s32.totalorder %s14, 0
      %p87 = por %p85, %p86
      %p88 = scmp.ne.s32.totalorder %s74, %s75
      %p89 = scmp.eq.s32.totalorder %s15, 1
      %p90 = por %p88, %p89
      %p92 = scmp.ne.s32.totalorder %s75, %s91
      %p93 = scmp.eq.s32.totalorder %s15, 0
      %p94 = por %p92, %p93
      %s95 = ssub.s32 %s9, %s16
      %p96 = scmp.eq.s32.totalorder %s95, 0
      %s98 = sadd.s32 %s97, 1
      %s99 = scalar_select %p96, %s97, %s98
      %p102 = pneg %p96
      %p103 = scmp.eq.s32.totalorder %s9, 1
      %p104 = por %p102, %p103
      %p105 = scmp.ne.s32.totalorder %s97, %s100
      %p106 = scmp.eq.s32.totalorder %s9, 0
      %p107 = por %p105, %p106
      %p108 = scmp.ne.s32.totalorder %s97, %s100
      %p109 = scmp.eq.s32.totalorder %s14, 1
      %p110 = por %p108, %p109
      %p111 = scmp.ne.s32.totalorder %s100, %s101
      %p112 = scmp.eq.s32.totalorder %s14, 0
      %p113 = por %p111, %p112
      %p114 = scmp.ne.s32.totalorder %s100, %s101
      %p115 = scmp.eq.s32.totalorder %s15, 1
      %p116 = por %p114, %p115
      %p118 = scmp.ne.s32.totalorder %s101, %s117
      %p119 = scmp.eq.s32.totalorder %s15, 0
      %p120 = por %p118, %p119
      %p121 = scmp.le.s32.totalorder 1, %s9
      %p122 = scmp.lt.s32.totalorder %s9, 3
      %p123 = pnand %p121, %p122
      %p124 = pneg %p123
      // Predicated region
      $region9: #{tpu_custom_call.1} parent=5 // pred_check
        _
      $region10: #{tpu_custom_call.1} parent=5 // pred_check_branch
        %126 = sbr.rel (%p123) target = $region12
      $region11: #{tpu_custom_call.1} parent=5 // pred_region
        %s127 = ssub.s32 %s9, 1
      $region12: #{tpu_custom_call.1} parent=5 // pred_fallthru
        _
      %p128 = scmp.lt.s32.totalorder %s9, 2
      // Predicated region
      $region13: #{tpu_custom_call.1} parent=5 // pred_check
        %p129 = pneg %p128
      $region14: #{tpu_custom_call.1} parent=5 // pred_check_branch
        %131 = sbr.rel (%p129) target = $region16
      $region15: #{tpu_custom_call.1} parent=5 // pred_region
        // Predicated region
        $region17: #{tpu_custom_call.1} parent=15 // pred_check
          %p132 = pneg %p29
        $region18: #{tpu_custom_call.1} parent=15 // pred_check_branch
          %134 = sbr.rel (%p132) target = $region20
        $region19: #{tpu_custom_call.1} parent=15 // pred_region
          %s135 = sand.u32 %s19, 1
          %s136 = sand.u32 %s19, 1
          %s137 = smul.addr %s136, 128
          %s138 = scalar_lea.vmem [#allocation2], %s137
          %s139 = smul.u32 8, %s9
          %s140 = smul.addr %s139, 2
          %s141 = smul.addr %s140, 4
          %s142 = scalar_lea.vmem %s0, %s141
          // Predicated region
          $region21: #{tpu_custom_call.1} parent=19 // pred_check
            _
          $region22: #{tpu_custom_call.1} parent=19 // pred_check_branch
            %144 = sbr.rel (0) target = $region24
          $region23: #{tpu_custom_call.1} parent=19 // pred_region
            // Predicated region
            $region25: #{tpu_custom_call.1} parent=23 // pred_check
              _
            $region26: #{tpu_custom_call.1} parent=23 // pred_check_branch
              %146 = sbr.rel (0) target = $region28
            $region27: #{tpu_custom_call.1} parent=23 // pred_region
              // Predicated region
              $region40: #{tpu_custom_call.1} parent=27 // pred_check
                _
              $region41: #{tpu_custom_call.1} parent=27 // pred_check_branch
                %192 = sbr.rel (0) target = $region43
              $region42: #{tpu_custom_call.1} parent=27 // pred_region
                loop: start=0, step=1, limit=1
                $region44: #{tpu_custom_call.1} parent=42 // loop_pre_header
                  _
                $region45: #{tpu_custom_call.1} parent=42 // loop_header
                  %s194 = sphi 0, %s198
                  %p195 = scmp.ge.s32.totalorder %s194, 1
                  %s199 = sphi %s142, %s142
                  %s200 = sphi %s138, %s138
                $region46: #{tpu_custom_call.1} parent=42 // loop_header_branch
                  %197 = sbr.rel (%p195) target = $region50
                $region47: #{tpu_custom_call.1} parent=42 // loop_body
                  %v201 = vld [vmem:[%s199] sm:$0xff]
                  %202 = vst [vmem:[%s200] sm:$0xff] %v201
                  %v203 = vld [vmem:[%s199 + $0x8] sm:$0xff]
                  %204 = vst [vmem:[%s200 + $0x8] sm:$0xff] %v203
                  %v205 = vld [vmem:[%s199 + $0x10] sm:$0xff]
                  %206 = vst [vmem:[%s200 + $0x10] sm:$0xff] %v205
                  %v207 = vld [vmem:[%s199 + $0x18] sm:$0xff]
                  %208 = vst [vmem:[%s200 + $0x18] sm:$0xff] %v207
                  %v209 = vld [vmem:[%s199 + $0x20] sm:$0xff]
                  %210 = vst [vmem:[%s200 + $0x20] sm:$0xff] %v209
                  %v211 = vld [vmem:[%s199 + $0x28] sm:$0xff]
                  %212 = vst [vmem:[%s200 + $0x28] sm:$0xff] %v211
                  %v213 = vld [vmem:[%s199 + $0x30] sm:$0xff]
                  %214 = vst [vmem:[%s200 + $0x30] sm:$0xff] %v213
                  %v215 = vld [vmem:[%s199 + $0x38] sm:$0xff]
                  %216 = vst [vmem:[%s200 + $0x38] sm:$0xff] %v215
                  %v217 = vld [vmem:[%s199 + $0x80] sm:$0xff]
                  %218 = vst [vmem:[%s200 + $0x40] sm:$0xff] %v217
                  %v219 = vld [vmem:[%s199 + $0x88] sm:$0xff]
                  %220 = vst [vmem:[%s200 + $0x48] sm:$0xff] %v219
                  %v221 = vld [vmem:[%s199 + $0x90] sm:$0xff]
                  %222 = vst [vmem:[%s200 + $0x50] sm:$0xff] %v221
                  %v223 = vld [vmem:[%s199 + $0x98] sm:$0xff]
                  %224 = vst [vmem:[%s200 + $0x58] sm:$0xff] %v223
                  %v225 = vld [vmem:[%s199 + $0xa0] sm:$0xff]
                  %226 = vst [vmem:[%s200 + $0x60] sm:$0xff] %v225
                  %v227 = vld [vmem:[%s199 + $0xa8] sm:$0xff]
                  %228 = vst [vmem:[%s200 + $0x68] sm:$0xff] %v227
                  %v229 = vld [vmem:[%s199 + $0xb0] sm:$0xff]
                  %230 = vst [vmem:[%s200 + $0x70] sm:$0xff] %v229
                  %v231 = vld [vmem:[%s199 + $0xb8] sm:$0xff]
                  %232 = vst [vmem:[%s200 + $0x78] sm:$0xff] %v231
                $region48: #{tpu_custom_call.1} parent=42 // loop_footer
                  %s198 = sadd.s32 1, %s194
                $region49: #{tpu_custom_call.1} parent=42 // loop_footer_branch
                  %193 = sbr.rel target = $region45
                $region50: #{tpu_custom_call.1} parent=42 // loop_exit
                  _
              $region43: #{tpu_custom_call.1} parent=27 // pred_fallthru
                _
              // Predicated region
              $region51: #{tpu_custom_call.1} parent=27 // pred_check
                _
              $region52: #{tpu_custom_call.1} parent=27 // pred_check_branch
                %234 = sbr.rel target = $region54
              $region53: #{tpu_custom_call.1} parent=27 // pred_region
                _
              $region54: #{tpu_custom_call.1} parent=27 // pred_fallthru
                _
            $region28: #{tpu_custom_call.1} parent=23 // pred_fallthru
              _
            // Predicated region
            $region29: #{tpu_custom_call.1} parent=23 // pred_check
              _
            $region30: #{tpu_custom_call.1} parent=23 // pred_check_branch
              %148 = sbr.rel target = $region32
            $region31: #{tpu_custom_call.1} parent=23 // pred_region
              %s150 = ssub.s32 256, 1
              loop: start=0, step=1, limit=1
              $region33: #{tpu_custom_call.1} parent=31 // loop_pre_header
                _
              $region34: #{tpu_custom_call.1} parent=31 // loop_header
                %s152 = sphi 0, %s156
                %p153 = scmp.ge.s32.totalorder %s152, 1
                %s157 = sphi %s142, %s142
                %s158 = sphi %s138, %s138
              $region35: #{tpu_custom_call.1} parent=31 // loop_header_branch
                %155 = sbr.rel (%p153) target = $region39
              $region36: #{tpu_custom_call.1} parent=31 // loop_body
                %v159 = vld [vmem:[%s157] sm:%s150]
                %160 = vst [vmem:[%s158] sm:%s150] %v159
                %v161 = vld [vmem:[%s157 + $0x8] sm:%s150]
                %162 = vst [vmem:[%s158 + $0x8] sm:%s150] %v161
                %v163 = vld [vmem:[%s157 + $0x10] sm:%s150]
                %164 = vst [vmem:[%s158 + $0x10] sm:%s150] %v163
                %v165 = vld [vmem:[%s157 + $0x18] sm:%s150]
                %166 = vst [vmem:[%s158 + $0x18] sm:%s150] %v165
                %v167 = vld [vmem:[%s157 + $0x20] sm:%s150]
                %168 = vst [vmem:[%s158 + $0x20] sm:%s150] %v167
                %v169 = vld [vmem:[%s157 + $0x28] sm:%s150]
                %170 = vst [vmem:[%s158 + $0x28] sm:%s150] %v169
                %v171 = vld [vmem:[%s157 + $0x30] sm:%s150]
                %172 = vst [vmem:[%s158 + $0x30] sm:%s150] %v171
                %v173 = vld [vmem:[%s157 + $0x38] sm:%s150]
                %174 = vst [vmem:[%s158 + $0x38] sm:%s150] %v173
                %v175 = vld [vmem:[%s157 + $0x80] sm:%s150]
                %176 = vst [vmem:[%s158 + $0x40] sm:%s150] %v175
                %v177 = vld [vmem:[%s157 + $0x88] sm:%s150]
                %178 = vst [vmem:[%s158 + $0x48] sm:%s150] %v177
                %v179 = vld [vmem:[%s157 + $0x90] sm:%s150]
                %180 = vst [vmem:[%s158 + $0x50] sm:%s150] %v179
                %v181 = vld [vmem:[%s157 + $0x98] sm:%s150]
                %182 = vst [vmem:[%s158 + $0x58] sm:%s150] %v181
                %v183 = vld [vmem:[%s157 + $0xa0] sm:%s150]
                %184 = vst [vmem:[%s158 + $0x60] sm:%s150] %v183
                %v185 = vld [vmem:[%s157 + $0xa8] sm:%s150]
                %186 = vst [vmem:[%s158 + $0x68] sm:%s150] %v185
                %v187 = vld [vmem:[%s157 + $0xb0] sm:%s150]
                %188 = vst [vmem:[%s158 + $0x70] sm:%s150] %v187
                %v189 = vld [vmem:[%s157 + $0xb8] sm:%s150]
                %190 = vst [vmem:[%s158 + $0x78] sm:%s150] %v189
              $region37: #{tpu_custom_call.1} parent=31 // loop_footer
                %s156 = sadd.s32 1, %s152
              $region38: #{tpu_custom_call.1} parent=31 // loop_footer_branch
                %151 = sbr.rel target = $region34
              $region39: #{tpu_custom_call.1} parent=31 // loop_exit
                _
            $region32: #{tpu_custom_call.1} parent=23 // pred_fallthru
              _
          $region24: #{tpu_custom_call.1} parent=19 // pred_fallthru
            _
          %235 = vnop
        $region20: #{tpu_custom_call.1} parent=15 // pred_fallthru
          _
        // Predicated region
        $region55: #{tpu_custom_call.1} parent=15 // pred_check
          %p236 = pneg %p55
        $region56: #{tpu_custom_call.1} parent=15 // pred_check_branch
          %238 = sbr.rel (%p236) target = $region58
        $region57: #{tpu_custom_call.1} parent=15 // pred_region
          %s239 = smul.u32 8, %s9
          %p240 = scmp.lt.s32.totalorder %s239, 15
          %s241 = scalar_select %p240, %s239, 15
          %s242 = scalar_lea.vmem %s1, %s241
          %s243 = smul.u32 8, %s9
        $region58: #{tpu_custom_call.1} parent=15 // pred_fallthru
          _
        // Predicated region
        $region59: #{tpu_custom_call.1} parent=15 // pred_check
          %p244 = pneg %p81
        $region60: #{tpu_custom_call.1} parent=15 // pred_check_branch
          %246 = sbr.rel (%p244) target = $region62
        $region61: #{tpu_custom_call.1} parent=15 // pred_region
          %s247 = smul.u32 8, %s9
          %p248 = scmp.lt.s32.totalorder %s247, 15
          %s249 = scalar_select %p248, %s247, 15
          %s250 = scalar_lea.vmem %s2, %s249
          %s251 = smul.u32 8, %s9
        $region62: #{tpu_custom_call.1} parent=15 // pred_fallthru
          _
      $region16: #{tpu_custom_call.1} parent=5 // pred_fallthru
        _
      %p252 = scmp.le.s32.totalorder 1, %s9
      %p253 = scmp.lt.s32.totalorder %s9, 3
      %p254 = pnand %p252, %p253
      %p255 = pneg %p254
      // Predicated region
      $region63: #{tpu_custom_call.1} parent=5 // pred_check
        _
      $region64: #{tpu_custom_call.1} parent=5 // pred_check_branch
        %257 = sbr.rel (%p254) target = $region66
      $region65: #{tpu_custom_call.1} parent=5 // pred_region
        %s258 = ssub.s32 %s9, 1
        %s259 = sand.u32 %s22, 1
        %s260 = sand.u32 %s22, 1
        %s261 = smul.addr %s260, 128
        %s262 = scalar_lea.vmem [#allocation2], %s261
        // Predicated region
        $region67: #{tpu_custom_call.1} parent=65 // pred_check
          %p263 = pneg %p35
        $region68: #{tpu_custom_call.1} parent=65 // pred_check_branch
          %265 = sbr.rel (%p263) target = $region70
        $region69: #{tpu_custom_call.1} parent=65 // pred_region
          _
        $region70: #{tpu_custom_call.1} parent=65 // pred_fallthru
          _
        %s266 = sand.u32 %s22, 1
        %s267 = sand.u32 %s22, 1
        %s268 = smul.addr %s267, 128
        %s269 = scalar_lea.vmem [#allocation2], %s268
        %p270 = pneg %p35
        %p271 = pneg %p32
        %s272 = smul.u32 8, %s14
        %p273 = scmp.lt.s32.totalorder %s272, 15
        %s274 = scalar_select %p273, %s272, 15
        %s275 = scalar_lea.vmem %s1, %s274
        %p276 = pneg %p61
        %p277 = pneg %p58
        %s278 = smul.u32 8, %s14
        %p279 = scmp.lt.s32.totalorder %s278, 15
        %s280 = scalar_select %p279, %s278, 15
        %s281 = scalar_lea.vmem %s2, %s280
        %p282 = pneg %p87
        %p283 = pneg %p84
        %p284 = pneg %p113
        %p285 = pneg %p110
        %s286 = sand.u32 %s100, 1
        %s287 = sand.u32 %s100, 1
        %s288 = smul.addr %s287, 128
        %s289 = scalar_lea.vmem [#allocation3], %s288
        %s290 = smul.u32 8, %s14
        %s291 = smul.u32 8, %s14
        %p292 = scmp.lt.s32.totalorder %s291, 15
        %s293 = scalar_select %p292, %s291, 15
        %s294 = scalar_lea.vmem %s1, %s293
        %s295 = smul.u32 8, %s14
        %s296 = smul.u32 8, %s14
        %p297 = scmp.lt.s32.totalorder %s296, 15
        %s298 = scalar_select %p297, %s296, 15
        %s299 = scalar_lea.vmem %s2, %s298
        %s300 = smul.u32 8, %s14
        %s301 = smul.u32 8, %s14
        %v302 = vld [vmem:[%s262] sm:$0x77]
        %v303 = vld [vmem:[%s262 + $0x8] sm:$0x77]
        %v304 = vld [vmem:[%s262 + $0x10] sm:$0x77]
        %v305 = vld [vmem:[%s262 + $0x18] sm:$0x77]
        %v306 = vld [vmem:[%s262 + $0x20] sm:$0x77]
        %v307 = vld [vmem:[%s262 + $0x28] sm:$0x77]
        %v308 = vld [vmem:[%s262 + $0x30] sm:$0x77]
        %v309 = vld [vmem:[%s262 + $0x38] sm:$0x77]
        %v310 = vld [vmem:[%s262 + $0x40] sm:$0x77]
        %v311 = vld [vmem:[%s262 + $0x48] sm:$0x77]
        %v312 = vld [vmem:[%s262 + $0x50] sm:$0x77]
        %v313 = vld [vmem:[%s262 + $0x58] sm:$0x77]
        %v314 = vld [vmem:[%s262 + $0x60] sm:$0x77]
        %v315 = vld [vmem:[%s262 + $0x68] sm:$0x77]
        %v316 = vld [vmem:[%s262 + $0x70] sm:$0x77]
        %v317 = vld [vmem:[%s262 + $0x78] sm:$0x77]
        %v318 = vmul.f32 %v302, %v302
        %v319 = vmul.f32 %v303, %v303
        %v320 = vmul.f32 %v304, %v304
        %v321 = vmul.f32 %v305, %v305
        %v322 = vmul.f32 %v306, %v306
        %v323 = vmul.f32 %v307, %v307
        %v324 = vmul.f32 %v308, %v308
        %v325 = vmul.f32 %v309, %v309
        %v326 = vmul.f32 %v310, %v310
        %v327 = vmul.f32 %v311, %v311
        %v328 = vmul.f32 %v312, %v312
        %v329 = vmul.f32 %v313, %v313
        %v330 = vmul.f32 %v314, %v314
        %v331 = vmul.f32 %v315, %v315
        %v332 = vmul.f32 %v316, %v316
        %v333 = vmul.f32 %v317, %v317
        %v350 = vcombine.high %v318, %v318
        %v351 = vcombine.high %v319, %v319
        %v352 = vcombine.high %v320, %v320
        %v353 = vcombine.high %v321, %v321
        %v354 = vcombine.high %v322, %v322
        %v355 = vcombine.high %v323, %v323
        %v356 = vcombine.high %v324, %v324
        %v357 = vcombine.high %v325, %v325
        %v358 = vcombine.high %v326, %v326
        %v359 = vcombine.high %v327, %v327
        %v360 = vcombine.high %v328, %v328
        %v361 = vcombine.high %v329, %v329
        %v362 = vcombine.high %v330, %v330
        %v363 = vcombine.high %v331, %v331
        %v364 = vcombine.high %v332, %v332
        %v365 = vcombine.high %v333, %v333
        %vm382 = vcmask 1042432
        %v383 = vsel %vm382, %v318, 0.0
        %v384 = vrot.slane %v383, 4
        %v385 = vadd.f32 %v383, %v384
        %v386 = vrot.slane %v385, 2
        %v387 = vadd.f32 %v385, %v386
        %v388 = vrot.slane %v387, 1
        %v389 = vadd.f32 %v387, %v388
        %v390 = vsel %vm382, %v350, 0.0
        %v391 = vrot.slane %v390, 4
        %v392 = vadd.f32 %v390, %v391
        %v393 = vrot.slane %v392, 2
        %v394 = vadd.f32 %v392, %v393
        %v395 = vrot.slane %v394, 1
        %v396 = vadd.f32 %v394, %v395
        %v397 = vsel %vm382, %v319, 0.0
        %v398 = vrot.slane %v397, 4
        %v399 = vadd.f32 %v397, %v398
        %v400 = vrot.slane %v399, 2
        %v401 = vadd.f32 %v399, %v400
        %v402 = vrot.slane %v401, 1
        %v403 = vadd.f32 %v401, %v402
        %v404 = vsel %vm382, %v351, 0.0
        %v405 = vrot.slane %v404, 4
        %v406 = vadd.f32 %v404, %v405
        %v407 = vrot.slane %v406, 2
        %v408 = vadd.f32 %v406, %v407
        %v409 = vrot.slane %v408, 1
        %v410 = vadd.f32 %v408, %v409
        %v411 = vsel %vm382, %v320, 0.0
        %v412 = vrot.slane %v411, 4
        %v413 = vadd.f32 %v411, %v412
        %v414 = vrot.slane %v413, 2
        %v415 = vadd.f32 %v413, %v414
        %v416 = vrot.slane %v415, 1
        %v417 = vadd.f32 %v415, %v416
        %v418 = vsel %vm382, %v352, 0.0
        %v419 = vrot.slane %v418, 4
        %v420 = vadd.f32 %v418, %v419
        %v421 = vrot.slane %v420, 2
        %v422 = vadd.f32 %v420, %v421
        %v423 = vrot.slane %v422, 1
        %v424 = vadd.f32 %v422, %v423
        %v425 = vsel %vm382, %v321, 0.0
        %v426 = vrot.slane %v425, 4
        %v427 = vadd.f32 %v425, %v426
        %v428 = vrot.slane %v427, 2
        %v429 = vadd.f32 %v427, %v428
        %v430 = vrot.slane %v429, 1
        %v431 = vadd.f32 %v429, %v430
        %v432 = vsel %vm382, %v353, 0.0
        %v433 = vrot.slane %v432, 4
        %v434 = vadd.f32 %v432, %v433
        %v435 = vrot.slane %v434, 2
        %v436 = vadd.f32 %v434, %v435
        %v437 = vrot.slane %v436, 1
        %v438 = vadd.f32 %v436, %v437
        %v439 = vsel %vm382, %v322, 0.0
        %v440 = vrot.slane %v439, 4
        %v441 = vadd.f32 %v439, %v440
        %v442 = vrot.slane %v441, 2
        %v443 = vadd.f32 %v441, %v442
        %v444 = vrot.slane %v443, 1
        %v445 = vadd.f32 %v443, %v444
        %v446 = vsel %vm382, %v354, 0.0
        %v447 = vrot.slane %v446, 4
        %v448 = vadd.f32 %v446, %v447
        %v449 = vrot.slane %v448, 2
        %v450 = vadd.f32 %v448, %v449
        %v451 = vrot.slane %v450, 1
        %v452 = vadd.f32 %v450, %v451
        %v453 = vsel %vm382, %v323, 0.0
        %v454 = vrot.slane %v453, 4
        %v455 = vadd.f32 %v453, %v454
        %v456 = vrot.slane %v455, 2
        %v457 = vadd.f32 %v455, %v456
        %v458 = vrot.slane %v457, 1
        %v459 = vadd.f32 %v457, %v458
        %v460 = vsel %vm382, %v355, 0.0
        %v461 = vrot.slane %v460, 4
        %v462 = vadd.f32 %v460, %v461
        %v463 = vrot.slane %v462, 2
        %v464 = vadd.f32 %v462, %v463
        %v465 = vrot.slane %v464, 1
        %v466 = vadd.f32 %v464, %v465
        %v467 = vsel %vm382, %v324, 0.0
        %v468 = vrot.slane %v467, 4
        %v469 = vadd.f32 %v467, %v468
        %v470 = vrot.slane %v469, 2
        %v471 = vadd.f32 %v469, %v470
        %v472 = vrot.slane %v471, 1
        %v473 = vadd.f32 %v471, %v472
        %v474 = vsel %vm382, %v356, 0.0
        %v475 = vrot.slane %v474, 4
        %v476 = vadd.f32 %v474, %v475
        %v477 = vrot.slane %v476, 2
        %v478 = vadd.f32 %v476, %v477
        %v479 = vrot.slane %v478, 1
        %v480 = vadd.f32 %v478, %v479
        %v481 = vsel %vm382, %v325, 0.0
        %v482 = vrot.slane %v481, 4
        %v483 = vadd.f32 %v481, %v482
        %v484 = vrot.slane %v483, 2
        %v485 = vadd.f32 %v483, %v484
        %v486 = vrot.slane %v485, 1
        %v487 = vadd.f32 %v485, %v486
        %v488 = vsel %vm382, %v357, 0.0
        %v489 = vrot.slane %v488, 4
        %v490 = vadd.f32 %v488, %v489
        %v491 = vrot.slane %v490, 2
        %v492 = vadd.f32 %v490, %v491
        %v493 = vrot.slane %v492, 1
        %v494 = vadd.f32 %v492, %v493
        %v495 = vsel %vm382, %v326, 0.0
        %v496 = vrot.slane %v495, 4
        %v497 = vadd.f32 %v495, %v496
        %v498 = vrot.slane %v497, 2
        %v499 = vadd.f32 %v497, %v498
        %v500 = vrot.slane %v499, 1
        %v501 = vadd.f32 %v499, %v500
        %v502 = vsel %vm382, %v358, 0.0
        %v503 = vrot.slane %v502, 4
        %v504 = vadd.f32 %v502, %v503
        %v505 = vrot.slane %v504, 2
        %v506 = vadd.f32 %v504, %v505
        %v507 = vrot.slane %v506, 1
        %v508 = vadd.f32 %v506, %v507
        %v509 = vsel %vm382, %v327, 0.0
        %v510 = vrot.slane %v509, 4
        %v511 = vadd.f32 %v509, %v510
        %v512 = vrot.slane %v511, 2
        %v513 = vadd.f32 %v511, %v512
        %v514 = vrot.slane %v513, 1
        %v515 = vadd.f32 %v513, %v514
        %v516 = vsel %vm382, %v359, 0.0
        %v517 = vrot.slane %v516, 4
        %v518 = vadd.f32 %v516, %v517
        %v519 = vrot.slane %v518, 2
        %v520 = vadd.f32 %v518, %v519
        %v521 = vrot.slane %v520, 1
        %v522 = vadd.f32 %v520, %v521
        %v523 = vsel %vm382, %v328, 0.0
        %v524 = vrot.slane %v523, 4
        %v525 = vadd.f32 %v523, %v524
        %v526 = vrot.slane %v525, 2
        %v527 = vadd.f32 %v525, %v526
        %v528 = vrot.slane %v527, 1
        %v529 = vadd.f32 %v527, %v528
        %v530 = vsel %vm382, %v360, 0.0
        %v531 = vrot.slane %v530, 4
        %v532 = vadd.f32 %v530, %v531
        %v533 = vrot.slane %v532, 2
        %v534 = vadd.f32 %v532, %v533
        %v535 = vrot.slane %v534, 1
        %v536 = vadd.f32 %v534, %v535
        %v537 = vsel %vm382, %v329, 0.0
        %v538 = vrot.slane %v537, 4
        %v539 = vadd.f32 %v537, %v538
        %v540 = vrot.slane %v539, 2
        %v541 = vadd.f32 %v539, %v540
        %v542 = vrot.slane %v541, 1
        %v543 = vadd.f32 %v541, %v542
        %v544 = vsel %vm382, %v361, 0.0
        %v545 = vrot.slane %v544, 4
        %v546 = vadd.f32 %v544, %v545
        %v547 = vrot.slane %v546, 2
        %v548 = vadd.f32 %v546, %v547
        %v549 = vrot.slane %v548, 1
        %v550 = vadd.f32 %v548, %v549
        %v551 = vsel %vm382, %v330, 0.0
        %v552 = vrot.slane %v551, 4
        %v553 = vadd.f32 %v551, %v552
        %v554 = vrot.slane %v553, 2
        %v555 = vadd.f32 %v553, %v554
        %v556 = vrot.slane %v555, 1
        %v557 = vadd.f32 %v555, %v556
        %v558 = vsel %vm382, %v362, 0.0
        %v559 = vrot.slane %v558, 4
        %v560 = vadd.f32 %v558, %v559
        %v561 = vrot.slane %v560, 2
        %v562 = vadd.f32 %v560, %v561
        %v563 = vrot.slane %v562, 1
        %v564 = vadd.f32 %v562, %v563
        %v565 = vsel %vm382, %v331, 0.0
        %v566 = vrot.slane %v565, 4
        %v567 = vadd.f32 %v565, %v566
        %v568 = vrot.slane %v567, 2
        %v569 = vadd.f32 %v567, %v568
        %v570 = vrot.slane %v569, 1
        %v571 = vadd.f32 %v569, %v570
        %v572 = vsel %vm382, %v363, 0.0
        %v573 = vrot.slane %v572, 4
        %v574 = vadd.f32 %v572, %v573
        %v575 = vrot.slane %v574, 2
        %v576 = vadd.f32 %v574, %v575
        %v577 = vrot.slane %v576, 1
        %v578 = vadd.f32 %v576, %v577
        %v579 = vsel %vm382, %v332, 0.0
        %v580 = vrot.slane %v579, 4
        %v581 = vadd.f32 %v579, %v580
        %v582 = vrot.slane %v581, 2
        %v583 = vadd.f32 %v581, %v582
        %v584 = vrot.slane %v583, 1
        %v585 = vadd.f32 %v583, %v584
        %v586 = vsel %vm382, %v364, 0.0
        %v587 = vrot.slane %v586, 4
        %v588 = vadd.f32 %v586, %v587
        %v589 = vrot.slane %v588, 2
        %v590 = vadd.f32 %v588, %v589
        %v591 = vrot.slane %v590, 1
        %v592 = vadd.f32 %v590, %v591
        %v593 = vsel %vm382, %v333, 0.0
        %v594 = vrot.slane %v593, 4
        %v595 = vadd.f32 %v593, %v594
        %v596 = vrot.slane %v595, 2
        %v597 = vadd.f32 %v595, %v596
        %v598 = vrot.slane %v597, 1
        %v599 = vadd.f32 %v597, %v598
        %v600 = vsel %vm382, %v365, 0.0
        %v601 = vrot.slane %v600, 4
        %v602 = vadd.f32 %v600, %v601
        %v603 = vrot.slane %v602, 2
        %v604 = vadd.f32 %v602, %v603
        %v605 = vrot.slane %v604, 1
        %v606 = vadd.f32 %v604, %v605
        %v607 = vrsqrt.pop %v389
        %v608 = vmul.f32 %v389, %v607
        %vm609 = vcmp.eq.f32.partialorder %v389, inf
        %v610 = vsel %vm609, %v389, %v608
        %vm611 = vcmp.eq.f32.partialorder %v389, 0.0
        %v612 = vand.u32 %v389, 2147483648
        %v613 = vsel %vm611, %v612, %v610
        %v614 = vrsqrt.pop %v396
        %v615 = vmul.f32 %v396, %v614
        %vm616 = vcmp.eq.f32.partialorder %v396, inf
        %v617 = vsel %vm616, %v396, %v615
        %vm618 = vcmp.eq.f32.partialorder %v396, 0.0
        %v619 = vand.u32 %v396, 2147483648
        %v620 = vsel %vm618, %v619, %v617
        %v621 = vrsqrt.pop %v403
        %v622 = vmul.f32 %v403, %v621
        %vm623 = vcmp.eq.f32.partialorder %v403, inf
        %v624 = vsel %vm623, %v403, %v622
        %vm625 = vcmp.eq.f32.partialorder %v403, 0.0
        %v626 = vand.u32 %v403, 2147483648
        %v627 = vsel %vm625, %v626, %v624
        %v628 = vrsqrt.pop %v410
        %v629 = vmul.f32 %v410, %v628
        %vm630 = vcmp.eq.f32.partialorder %v410, inf
        %v631 = vsel %vm630, %v410, %v629
        %vm632 = vcmp.eq.f32.partialorder %v410, 0.0
        %v633 = vand.u32 %v410, 2147483648
        %v634 = vsel %vm632, %v633, %v631
        %v635 = vrsqrt.pop %v417
        %v636 = vmul.f32 %v417, %v635
        %vm637 = vcmp.eq.f32.partialorder %v417, inf
        %v638 = vsel %vm637, %v417, %v636
        %vm639 = vcmp.eq.f32.partialorder %v417, 0.0
        %v640 = vand.u32 %v417, 2147483648
        %v641 = vsel %vm639, %v640, %v638
        %v642 = vrsqrt.pop %v424
        %v643 = vmul.f32 %v424, %v642
        %vm644 = vcmp.eq.f32.partialorder %v424, inf
        %v645 = vsel %vm644, %v424, %v643
        %vm646 = vcmp.eq.f32.partialorder %v424, 0.0
        %v647 = vand.u32 %v424, 2147483648
        %v648 = vsel %vm646, %v647, %v645
        %v649 = vrsqrt.pop %v431
        %v650 = vmul.f32 %v431, %v649
        %vm651 = vcmp.eq.f32.partialorder %v431, inf
        %v652 = vsel %vm651, %v431, %v650
        %vm653 = vcmp.eq.f32.partialorder %v431, 0.0
        %v654 = vand.u32 %v431, 2147483648
        %v655 = vsel %vm653, %v654, %v652
        %v656 = vrsqrt.pop %v438
        %v657 = vmul.f32 %v438, %v656
        %vm658 = vcmp.eq.f32.partialorder %v438, inf
        %v659 = vsel %vm658, %v438, %v657
        %vm660 = vcmp.eq.f32.partialorder %v438, 0.0
        %v661 = vand.u32 %v438, 2147483648
        %v662 = vsel %vm660, %v661, %v659
        %v663 = vrsqrt.pop %v445
        %v664 = vmul.f32 %v445, %v663
        %vm665 = vcmp.eq.f32.partialorder %v445, inf
        %v666 = vsel %vm665, %v445, %v664
        %vm667 = vcmp.eq.f32.partialorder %v445, 0.0
        %v668 = vand.u32 %v445, 2147483648
        %v669 = vsel %vm667, %v668, %v666
        %v670 = vrsqrt.pop %v452
        %v671 = vmul.f32 %v452, %v670
        %vm672 = vcmp.eq.f32.partialorder %v452, inf
        %v673 = vsel %vm672, %v452, %v671
        %vm674 = vcmp.eq.f32.partialorder %v452, 0.0
        %v675 = vand.u32 %v452, 2147483648
        %v676 = vsel %vm674, %v675, %v673
        %v677 = vrsqrt.pop %v459
        %v678 = vmul.f32 %v459, %v677
        %vm679 = vcmp.eq.f32.partialorder %v459, inf
        %v680 = vsel %vm679, %v459, %v678
        %vm681 = vcmp.eq.f32.partialorder %v459, 0.0
        %v682 = vand.u32 %v459, 2147483648
        %v683 = vsel %vm681, %v682, %v680
        %v684 = vrsqrt.pop %v466
        %v685 = vmul.f32 %v466, %v684
        %vm686 = vcmp.eq.f32.partialorder %v466, inf
        %v687 = vsel %vm686, %v466, %v685
        %vm688 = vcmp.eq.f32.partialorder %v466, 0.0
        %v689 = vand.u32 %v466, 2147483648
        %v690 = vsel %vm688, %v689, %v687
        %v691 = vrsqrt.pop %v473
        %v692 = vmul.f32 %v473, %v691
        %vm693 = vcmp.eq.f32.partialorder %v473, inf
        %v694 = vsel %vm693, %v473, %v692
        %vm695 = vcmp.eq.f32.partialorder %v473, 0.0
        %v696 = vand.u32 %v473, 2147483648
        %v697 = vsel %vm695, %v696, %v694
        %v698 = vrsqrt.pop %v480
        %v699 = vmul.f32 %v480, %v698
        %vm700 = vcmp.eq.f32.partialorder %v480, inf
        %v701 = vsel %vm700, %v480, %v699
        %vm702 = vcmp.eq.f32.partialorder %v480, 0.0
        %v703 = vand.u32 %v480, 2147483648
        %v704 = vsel %vm702, %v703, %v701
        %v705 = vrsqrt.pop %v487
        %v706 = vmul.f32 %v487, %v705
        %vm707 = vcmp.eq.f32.partialorder %v487, inf
        %v708 = vsel %vm707, %v487, %v706
        %vm709 = vcmp.eq.f32.partialorder %v487, 0.0
        %v710 = vand.u32 %v487, 2147483648
        %v711 = vsel %vm709, %v710, %v708
        %v712 = vrsqrt.pop %v494
        %v713 = vmul.f32 %v494, %v712
        %vm714 = vcmp.eq.f32.partialorder %v494, inf
        %v715 = vsel %vm714, %v494, %v713
        %vm716 = vcmp.eq.f32.partialorder %v494, 0.0
        %v717 = vand.u32 %v494, 2147483648
        %v718 = vsel %vm716, %v717, %v715
        %v719 = vrsqrt.pop %v501
        %v720 = vmul.f32 %v501, %v719
        %vm721 = vcmp.eq.f32.partialorder %v501, inf
        %v722 = vsel %vm721, %v501, %v720
        %vm723 = vcmp.eq.f32.partialorder %v501, 0.0
        %v724 = vand.u32 %v501, 2147483648
        %v725 = vsel %vm723, %v724, %v722
        %v726 = vrsqrt.pop %v508
        %v727 = vmul.f32 %v508, %v726
        %vm728 = vcmp.eq.f32.partialorder %v508, inf
        %v729 = vsel %vm728, %v508, %v727
        %vm730 = vcmp.eq.f32.partialorder %v508, 0.0
        %v731 = vand.u32 %v508, 2147483648
        %v732 = vsel %vm730, %v731, %v729
        %v733 = vrsqrt.pop %v515
        %v734 = vmul.f32 %v515, %v733
        %vm735 = vcmp.eq.f32.partialorder %v515, inf
        %v736 = vsel %vm735, %v515, %v734
        %vm737 = vcmp.eq.f32.partialorder %v515, 0.0
        %v738 = vand.u32 %v515, 2147483648
        %v739 = vsel %vm737, %v738, %v736
        %v740 = vrsqrt.pop %v522
        %v741 = vmul.f32 %v522, %v740
        %vm742 = vcmp.eq.f32.partialorder %v522, inf
        %v743 = vsel %vm742, %v522, %v741
        %vm744 = vcmp.eq.f32.partialorder %v522, 0.0
        %v745 = vand.u32 %v522, 2147483648
        %v746 = vsel %vm744, %v745, %v743
        %v747 = vrsqrt.pop %v529
        %v748 = vmul.f32 %v529, %v747
        %vm749 = vcmp.eq.f32.partialorder %v529, inf
        %v750 = vsel %vm749, %v529, %v748
        %vm751 = vcmp.eq.f32.partialorder %v529, 0.0
        %v752 = vand.u32 %v529, 2147483648
        %v753 = vsel %vm751, %v752, %v750
        %v754 = vrsqrt.pop %v536
        %v755 = vmul.f32 %v536, %v754
        %vm756 = vcmp.eq.f32.partialorder %v536, inf
        %v757 = vsel %vm756, %v536, %v755
        %vm758 = vcmp.eq.f32.partialorder %v536, 0.0
        %v759 = vand.u32 %v536, 2147483648
        %v760 = vsel %vm758, %v759, %v757
        %v761 = vrsqrt.pop %v543
        %v762 = vmul.f32 %v543, %v761
        %vm763 = vcmp.eq.f32.partialorder %v543, inf
        %v764 = vsel %vm763, %v543, %v762
        %vm765 = vcmp.eq.f32.partialorder %v543, 0.0
        %v766 = vand.u32 %v543, 2147483648
        %v767 = vsel %vm765, %v766, %v764
        %v768 = vrsqrt.pop %v550
        %v769 = vmul.f32 %v550, %v768
        %vm770 = vcmp.eq.f32.partialorder %v550, inf
        %v771 = vsel %vm770, %v550, %v769
        %vm772 = vcmp.eq.f32.partialorder %v550, 0.0
        %v773 = vand.u32 %v550, 2147483648
        %v774 = vsel %vm772, %v773, %v771
        %v775 = vrsqrt.pop %v557
        %v776 = vmul.f32 %v557, %v775
        %vm777 = vcmp.eq.f32.partialorder %v557, inf
        %v778 = vsel %vm777, %v557, %v776
        %vm779 = vcmp.eq.f32.partialorder %v557, 0.0
        %v780 = vand.u32 %v557, 2147483648
        %v781 = vsel %vm779, %v780, %v778
        %v782 = vrsqrt.pop %v564
        %v783 = vmul.f32 %v564, %v782
        %vm784 = vcmp.eq.f32.partialorder %v564, inf
        %v785 = vsel %vm784, %v564, %v783
        %vm786 = vcmp.eq.f32.partialorder %v564, 0.0
        %v787 = vand.u32 %v564, 2147483648
        %v788 = vsel %vm786, %v787, %v785
        %v789 = vrsqrt.pop %v571
        %v790 = vmul.f32 %v571, %v789
        %vm791 = vcmp.eq.f32.partialorder %v571, inf
        %v792 = vsel %vm791, %v571, %v790
        %vm793 = vcmp.eq.f32.partialorder %v571, 0.0
        %v794 = vand.u32 %v571, 2147483648
        %v795 = vsel %vm793, %v794, %v792
        %v796 = vrsqrt.pop %v578
        %v797 = vmul.f32 %v578, %v796
        %vm798 = vcmp.eq.f32.partialorder %v578, inf
        %v799 = vsel %vm798, %v578, %v797
        %vm800 = vcmp.eq.f32.partialorder %v578, 0.0
        %v801 = vand.u32 %v578, 2147483648
        %v802 = vsel %vm800, %v801, %v799
        %v803 = vrsqrt.pop %v585
        %v804 = vmul.f32 %v585, %v803
        %vm805 = vcmp.eq.f32.partialorder %v585, inf
        %v806 = vsel %vm805, %v585, %v804
        %vm807 = vcmp.eq.f32.partialorder %v585, 0.0
        %v808 = vand.u32 %v585, 2147483648
        %v809 = vsel %vm807, %v808, %v806
        %v810 = vrsqrt.pop %v592
        %v811 = vmul.f32 %v592, %v810
        %vm812 = vcmp.eq.f32.partialorder %v592, inf
        %v813 = vsel %vm812, %v592, %v811
        %vm814 = vcmp.eq.f32.partialorder %v592, 0.0
        %v815 = vand.u32 %v592, 2147483648
        %v816 = vsel %vm814, %v815, %v813
        %v817 = vrsqrt.pop %v599
        %v818 = vmul.f32 %v599, %v817
        %vm819 = vcmp.eq.f32.partialorder %v599, inf
        %v820 = vsel %vm819, %v599, %v818
        %vm821 = vcmp.eq.f32.partialorder %v599, 0.0
        %v822 = vand.u32 %v599, 2147483648
        %v823 = vsel %vm821, %v822, %v820
        %v824 = vrsqrt.pop %v606
        %v825 = vmul.f32 %v606, %v824
        %vm826 = vcmp.eq.f32.partialorder %v606, inf
        %v827 = vsel %vm826, %v606, %v825
        %vm828 = vcmp.eq.f32.partialorder %v606, 0.0
        %v829 = vand.u32 %v606, 2147483648
        %v830 = vsel %vm828, %v829, %v827
        %v831 = vadd.f32 %v613, 1e-06
        %v832 = vadd.f32 %v620, 1e-06
        %v833 = vadd.f32 %v627, 1e-06
        %v834 = vadd.f32 %v634, 1e-06
        %v835 = vadd.f32 %v641, 1e-06
        %v836 = vadd.f32 %v648, 1e-06
        %v837 = vadd.f32 %v655, 1e-06
        %v838 = vadd.f32 %v662, 1e-06
        %v839 = vadd.f32 %v669, 1e-06
        %v840 = vadd.f32 %v676, 1e-06
        %v841 = vadd.f32 %v683, 1e-06
        %v842 = vadd.f32 %v690, 1e-06
        %v843 = vadd.f32 %v697, 1e-06
        %v844 = vadd.f32 %v704, 1e-06
        %v845 = vadd.f32 %v711, 1e-06
        %v846 = vadd.f32 %v718, 1e-06
        %v847 = vadd.f32 %v725, 1e-06
        %v848 = vadd.f32 %v732, 1e-06
        %v849 = vadd.f32 %v739, 1e-06
        %v850 = vadd.f32 %v746, 1e-06
        %v851 = vadd.f32 %v753, 1e-06
        %v852 = vadd.f32 %v760, 1e-06
        %v853 = vadd.f32 %v767, 1e-06
        %v854 = vadd.f32 %v774, 1e-06
        %v855 = vadd.f32 %v781, 1e-06
        %v856 = vadd.f32 %v788, 1e-06
        %v857 = vadd.f32 %v795, 1e-06
        %v858 = vadd.f32 %v802, 1e-06
        %v859 = vadd.f32 %v809, 1e-06
        %v860 = vadd.f32 %v816, 1e-06
        %v861 = vadd.f32 %v823, 1e-06
        %v862 = vadd.f32 %v830, 1e-06
        %v863 = vadd.f32 %v831, %v832
        %864 = vadd.xlane.f32.xlu0 %v863
        %v865 = vpop.xlane.xlu0 %864
        %v866 = vadd.f32 %v833, %v834
        %867 = vadd.xlane.f32.xlu0 %v866
        %v868 = vpop.xlane.xlu0 %867
        %v869 = vadd.f32 %v835, %v836
        %870 = vadd.xlane.f32.xlu0 %v869
        %v871 = vpop.xlane.xlu0 %870
        %v872 = vadd.f32 %v837, %v838
        %873 = vadd.xlane.f32.xlu0 %v872
        %v874 = vpop.xlane.xlu0 %873
        %v875 = vadd.f32 %v839, %v840
        %876 = vadd.xlane.f32.xlu0 %v875
        %v877 = vpop.xlane.xlu0 %876
        %v878 = vadd.f32 %v841, %v842
        %879 = vadd.xlane.f32.xlu0 %v878
        %v880 = vpop.xlane.xlu0 %879
        %v881 = vadd.f32 %v843, %v844
        %882 = vadd.xlane.f32.xlu0 %v881
        %v883 = vpop.xlane.xlu0 %882
        %v884 = vadd.f32 %v845, %v846
        %885 = vadd.xlane.f32.xlu0 %v884
        %v886 = vpop.xlane.xlu0 %885
        %v887 = vadd.f32 %v847, %v848
        %888 = vadd.xlane.f32.xlu0 %v887
        %v889 = vpop.xlane.xlu0 %888
        %v890 = vadd.f32 %v849, %v850
        %891 = vadd.xlane.f32.xlu0 %v890
        %v892 = vpop.xlane.xlu0 %891
        %v893 = vadd.f32 %v851, %v852
        %894 = vadd.xlane.f32.xlu0 %v893
        %v895 = vpop.xlane.xlu0 %894
        %v896 = vadd.f32 %v853, %v854
        %897 = vadd.xlane.f32.xlu0 %v896
        %v898 = vpop.xlane.xlu0 %897
        %v899 = vadd.f32 %v855, %v856
        %900 = vadd.xlane.f32.xlu0 %v899
        %v901 = vpop.xlane.xlu0 %900
        %v902 = vadd.f32 %v857, %v858
        %903 = vadd.xlane.f32.xlu0 %v902
        %v904 = vpop.xlane.xlu0 %903
        %v905 = vadd.f32 %v859, %v860
        %906 = vadd.xlane.f32.xlu0 %v905
        %v907 = vpop.xlane.xlu0 %906
        %v908 = vadd.f32 %v861, %v862
        %909 = vadd.xlane.f32.xlu0 %v908
        %v910 = vpop.xlane.xlu0 %909
        %v911 = vadd.f32 %v865, %v889
        %v912 = vadd.f32 %v868, %v892
        %v913 = vadd.f32 %v871, %v895
        %v914 = vadd.f32 %v874, %v898
        %v915 = vadd.f32 %v877, %v901
        %v916 = vadd.f32 %v880, %v904
        %v917 = vadd.f32 %v883, %v907
        %v918 = vadd.f32 %v886, %v910
        %v919 = vmul.f32 %v911, 0.001953125
        %v920 = vmul.f32 %v912, 0.001953125
        %v921 = vmul.f32 %v913, 0.001953125
        %v922 = vmul.f32 %v914, 0.001953125
        %v923 = vmul.f32 %v915, 0.001953125
        %v924 = vmul.f32 %v916, 0.001953125
        %v925 = vmul.f32 %v917, 0.001953125
        %v926 = vmul.f32 %v918, 0.001953125
        %v927 = vsub.f32 %v831, %v919
        %v928 = vsub.f32 %v832, %v919
        %v929 = vsub.f32 %v833, %v920
        %v930 = vsub.f32 %v834, %v920
        %v931 = vsub.f32 %v835, %v921
        %v932 = vsub.f32 %v836, %v921
        %v933 = vsub.f32 %v837, %v922
        %v934 = vsub.f32 %v838, %v922
        %v935 = vsub.f32 %v839, %v923
        %v936 = vsub.f32 %v840, %v923
        %v937 = vsub.f32 %v841, %v924
        %v938 = vsub.f32 %v842, %v924
        %v939 = vsub.f32 %v843, %v925
        %v940 = vsub.f32 %v844, %v925
        %v941 = vsub.f32 %v845, %v926
        %v942 = vsub.f32 %v846, %v926
        %v943 = vsub.f32 %v847, %v919
        %v944 = vsub.f32 %v848, %v919
        %v945 = vsub.f32 %v849, %v920
        %v946 = vsub.f32 %v850, %v920
        %v947 = vsub.f32 %v851, %v921
        %v948 = vsub.f32 %v852, %v921
        %v949 = vsub.f32 %v853, %v922
        %v950 = vsub.f32 %v854, %v922
        %v951 = vsub.f32 %v855, %v923
        %v952 = vsub.f32 %v856, %v923
        %v953 = vsub.f32 %v857, %v924
        %v954 = vsub.f32 %v858, %v924
        %v955 = vsub.f32 %v859, %v925
        %v956 = vsub.f32 %v860, %v925
        %v957 = vsub.f32 %v861, %v926
        %v958 = vsub.f32 %v862, %v926
        %v959 = vmul.f32 %v927, %v927
        %v960 = vmul.f32 %v928, %v928
        %v961 = vmul.f32 %v929, %v929
        %v962 = vmul.f32 %v930, %v930
        %v963 = vmul.f32 %v931, %v931
        %v964 = vmul.f32 %v932, %v932
        %v965 = vmul.f32 %v933, %v933
        %v966 = vmul.f32 %v934, %v934
        %v967 = vmul.f32 %v935, %v935
        %v968 = vmul.f32 %v936, %v936
        %v969 = vmul.f32 %v937, %v937
        %v970 = vmul.f32 %v938, %v938
        %v971 = vmul.f32 %v939, %v939
        %v972 = vmul.f32 %v940, %v940
        %v973 = vmul.f32 %v941, %v941
        %v974 = vmul.f32 %v942, %v942
        %v975 = vmul.f32 %v943, %v943
        %v976 = vmul.f32 %v944, %v944
        %v977 = vmul.f32 %v945, %v945
        %v978 = vmul.f32 %v946, %v946
        %v979 = vmul.f32 %v947, %v947
        %v980 = vmul.f32 %v948, %v948
        %v981 = vmul.f32 %v949, %v949
        %v982 = vmul.f32 %v950, %v950
        %v983 = vmul.f32 %v951, %v951
        %v984 = vmul.f32 %v952, %v952
        %v985 = vmul.f32 %v953, %v953
        %v986 = vmul.f32 %v954, %v954
        %v987 = vmul.f32 %v955, %v955
        %v988 = vmul.f32 %v956, %v956
        %v989 = vmul.f32 %v957, %v957
        %v990 = vmul.f32 %v958, %v958
        %v991 = vadd.f32 %v959, %v960
        %992 = vadd.xlane.f32.xlu0 %v991
        %v993 = vpop.xlane.xlu0 %992
        %v994 = vadd.f32 %v961, %v962
        %995 = vadd.xlane.f32.xlu0 %v994
        %v996 = vpop.xlane.xlu0 %995
        %v997 = vadd.f32 %v963, %v964
        %998 = vadd.xlane.f32.xlu0 %v997
        %v999 = vpop.xlane.xlu0 %998
        %v1000 = vadd.f32 %v965, %v966
        %1001 = vadd.xlane.f32.xlu0 %v1000
        %v1002 = vpop.xlane.xlu0 %1001
        %v1003 = vadd.f32 %v967, %v968
        %1004 = vadd.xlane.f32.xlu0 %v1003
        %v1005 = vpop.xlane.xlu0 %1004
        %v1006 = vadd.f32 %v969, %v970
        %1007 = vadd.xlane.f32.xlu0 %v1006
        %v1008 = vpop.xlane.xlu0 %1007
        %v1009 = vadd.f32 %v971, %v972
        %1010 = vadd.xlane.f32.xlu0 %v1009
        %v1011 = vpop.xlane.xlu0 %1010
        %v1012 = vadd.f32 %v973, %v974
        %1013 = vadd.xlane.f32.xlu0 %v1012
        %v1014 = vpop.xlane.xlu0 %1013
        %v1015 = vadd.f32 %v975, %v976
        %1016 = vadd.xlane.f32.xlu0 %v1015
        %v1017 = vpop.xlane.xlu0 %1016
        %v1018 = vadd.f32 %v977, %v978
        %1019 = vadd.xlane.f32.xlu0 %v1018
        %v1020 = vpop.xlane.xlu0 %1019
        %v1021 = vadd.f32 %v979, %v980
        %1022 = vadd.xlane.f32.xlu0 %v1021
        %v1023 = vpop.xlane.xlu0 %1022
        %v1024 = vadd.f32 %v981, %v982
        %1025 = vadd.xlane.f32.xlu0 %v1024
        %v1026 = vpop.xlane.xlu0 %1025
        %v1027 = vadd.f32 %v983, %v984
        %1028 = vadd.xlane.f32.xlu0 %v1027
        %v1029 = vpop.xlane.xlu0 %1028
        %v1030 = vadd.f32 %v985, %v986
        %1031 = vadd.xlane.f32.xlu0 %v1030
        %v1032 = vpop.xlane.xlu0 %1031
        %v1033 = vadd.f32 %v987, %v988
        %1034 = vadd.xlane.f32.xlu0 %v1033
        %v1035 = vpop.xlane.xlu0 %1034
        %v1036 = vadd.f32 %v989, %v990
        %1037 = vadd.xlane.f32.xlu0 %v1036
        %v1038 = vpop.xlane.xlu0 %1037
        %v1039 = vadd.f32 %v993, %v1017
        %v1040 = vadd.f32 %v996, %v1020
        %v1041 = vadd.f32 %v999, %v1023
        %v1042 = vadd.f32 %v1002, %v1026
        %v1043 = vadd.f32 %v1005, %v1029
        %v1044 = vadd.f32 %v1008, %v1032
        %v1045 = vadd.f32 %v1011, %v1035
        %v1046 = vadd.f32 %v1014, %v1038
        %v1047 = vmul.f32 %v1039, 0.001953125
        %v1048 = vmul.f32 %v1040, 0.001953125
        %v1049 = vmul.f32 %v1041, 0.001953125
        %v1050 = vmul.f32 %v1042, 0.001953125
        %v1051 = vmul.f32 %v1043, 0.001953125
        %v1052 = vmul.f32 %v1044, 0.001953125
        %v1053 = vmul.f32 %v1045, 0.001953125
        %v1054 = vmul.f32 %v1046, 0.001953125
        %v1055 = vadd.f32 %v1047, 1e-05
        %v1056 = vadd.f32 %v1048, 1e-05
        %v1057 = vadd.f32 %v1049, 1e-05
        %v1058 = vadd.f32 %v1050, 1e-05
        %v1059 = vadd.f32 %v1051, 1e-05
        %v1060 = vadd.f32 %v1052, 1e-05
        %v1061 = vadd.f32 %v1053, 1e-05
        %v1062 = vadd.f32 %v1054, 1e-05
        %v1063 = vrsqrt.pop %v1055
        %v1064 = vrsqrt.pop %v1056
        %v1065 = vrsqrt.pop %v1057
        %v1066 = vrsqrt.pop %v1058
        %v1067 = vrsqrt.pop %v1059
        %v1068 = vrsqrt.pop %v1060
        %v1069 = vrsqrt.pop %v1061
        %v1070 = vrsqrt.pop %v1062
        %v1071 = vld [vmem:[%s294] sm:$0x1]
        %v1072 = vld [vmem:[%s294 + $0x1] sm:$0x1]
        %v1073 = vld [vmem:[%s294 + $0x2] sm:$0x1]
        %v1074 = vld [vmem:[%s294 + $0x3] sm:$0x1]
        %v1075 = vld [vmem:[%s294 + $0x4] sm:$0x1]
        %v1076 = vld [vmem:[%s294 + $0x5] sm:$0x1]
        %v1077 = vld [vmem:[%s294 + $0x6] sm:$0x1]
        %v1078 = vld [vmem:[%s294 + $0x7] sm:$0x1]
        %v1079 = vld [vmem:[%s299] sm:$0x1]
        %v1080 = vld [vmem:[%s299 + $0x1] sm:$0x1]
        %v1081 = vld [vmem:[%s299 + $0x2] sm:$0x1]
        %v1082 = vld [vmem:[%s299 + $0x3] sm:$0x1]
        %v1083 = vld [vmem:[%s299 + $0x4] sm:$0x1]
        %v1084 = vld [vmem:[%s299 + $0x5] sm:$0x1]
        %v1085 = vld [vmem:[%s299 + $0x6] sm:$0x1]
        %v1086 = vld [vmem:[%s299 + $0x7] sm:$0x1]
        %v1087 = vmul.f32 %v1071, %v1063
        %v1088 = vmul.f32 %v1072, %v1064
        %v1089 = vmul.f32 %v1073, %v1065
        %v1090 = vmul.f32 %v1074, %v1066
        %v1091 = vmul.f32 %v1075, %v1067
        %v1092 = vmul.f32 %v1076, %v1068
        %v1093 = vmul.f32 %v1077, %v1069
        %v1094 = vmul.f32 %v1078, %v1070
        %v1095 = vmul.f32 %v1071, %v919
        %v1096 = vmul.f32 %v1072, %v920
        %v1097 = vmul.f32 %v1073, %v921
        %v1098 = vmul.f32 %v1074, %v922
        %v1099 = vmul.f32 %v1075, %v923
        %v1100 = vmul.f32 %v1076, %v924
        %v1101 = vmul.f32 %v1077, %v925
        %v1102 = vmul.f32 %v1078, %v926
        %v1103 = vmul.f32 %v1095, %v1063
        %v1104 = vmul.f32 %v1096, %v1064
        %v1105 = vmul.f32 %v1097, %v1065
        %v1106 = vmul.f32 %v1098, %v1066
        %v1107 = vmul.f32 %v1099, %v1067
        %v1108 = vmul.f32 %v1100, %v1068
        %v1109 = vmul.f32 %v1101, %v1069
        %v1110 = vmul.f32 %v1102, %v1070
        %v1111 = vsub.f32 %v1079, %v1103
        %v1112 = vsub.f32 %v1080, %v1104
        %v1113 = vsub.f32 %v1081, %v1105
        %v1114 = vsub.f32 %v1082, %v1106
        %v1115 = vsub.f32 %v1083, %v1107
        %v1116 = vsub.f32 %v1084, %v1108
        %v1117 = vsub.f32 %v1085, %v1109
        %v1118 = vsub.f32 %v1086, %v1110
        %v1119 = vrcp.pop %v831
        %v1120 = vrcp.pop %v832
        %v1121 = vrcp.pop %v833
        %v1122 = vrcp.pop %v834
        %v1123 = vrcp.pop %v835
        %v1124 = vrcp.pop %v836
        %v1125 = vrcp.pop %v837
        %v1126 = vrcp.pop %v838
        %v1127 = vrcp.pop %v839
        %v1128 = vrcp.pop %v840
        %v1129 = vrcp.pop %v841
        %v1130 = vrcp.pop %v842
        %v1131 = vrcp.pop %v843
        %v1132 = vrcp.pop %v844
        %v1133 = vrcp.pop %v845
        %v1134 = vrcp.pop %v846
        %v1135 = vrcp.pop %v847
        %v1136 = vrcp.pop %v848
        %v1137 = vrcp.pop %v849
        %v1138 = vrcp.pop %v850
        %v1139 = vrcp.pop %v851
        %v1140 = vrcp.pop %v852
        %v1141 = vrcp.pop %v853
        %v1142 = vrcp.pop %v854
        %v1143 = vrcp.pop %v855
        %v1144 = vrcp.pop %v856
        %v1145 = vrcp.pop %v857
        %v1146 = vrcp.pop %v858
        %v1147 = vrcp.pop %v859
        %v1148 = vrcp.pop %v860
        %v1149 = vrcp.pop %v861
        %v1150 = vrcp.pop %v862
        %1152 = vset.pattern.permute.xlu0 0
        %1153 = vperm.xlu0 %1152, %v1111
        %v1154 = vpop.permute.xlu0 %1153
        %v1156 = vlaneseq
        %v1157 = vshrl.u32 %v1156, 7
        %v1158 = vsub.s32 0, %v1157
        %v1159 = vrot.slane %v1154, %v1158
        %1161 = vset.pattern.permute.xlu0 0
        %1162 = vperm.xlu0 %1161, %v1112
        %v1163 = vpop.permute.xlu0 %1162
        %v1165 = vlaneseq
        %v1166 = vshrl.u32 %v1165, 7
        %v1167 = vsub.s32 0, %v1166
        %v1168 = vrot.slane %v1163, %v1167
        %1170 = vset.pattern.permute.xlu0 0
        %1171 = vperm.xlu0 %1170, %v1113
        %v1172 = vpop.permute.xlu0 %1171
        %v1174 = vlaneseq
        %v1175 = vshrl.u32 %v1174, 7
        %v1176 = vsub.s32 0, %v1175
        %v1177 = vrot.slane %v1172, %v1176
        %1179 = vset.pattern.permute.xlu0 0
        %1180 = vperm.xlu0 %1179, %v1114
        %v1181 = vpop.permute.xlu0 %1180
        %v1183 = vlaneseq
        %v1184 = vshrl.u32 %v1183, 7
        %v1185 = vsub.s32 0, %v1184
        %v1186 = vrot.slane %v1181, %v1185
        %1188 = vset.pattern.permute.xlu0 0
        %1189 = vperm.xlu0 %1188, %v1115
        %v1190 = vpop.permute.xlu0 %1189
        %v1192 = vlaneseq
        %v1193 = vshrl.u32 %v1192, 7
        %v1194 = vsub.s32 0, %v1193
        %v1195 = vrot.slane %v1190, %v1194
        %1197 = vset.pattern.permute.xlu0 0
        %1198 = vperm.xlu0 %1197, %v1116
        %v1199 = vpop.permute.xlu0 %1198
        %v1201 = vlaneseq
        %v1202 = vshrl.u32 %v1201, 7
        %v1203 = vsub.s32 0, %v1202
        %v1204 = vrot.slane %v1199, %v1203
        %1206 = vset.pattern.permute.xlu0 0
        %1207 = vperm.xlu0 %1206, %v1117
        %v1208 = vpop.permute.xlu0 %1207
        %v1210 = vlaneseq
        %v1211 = vshrl.u32 %v1210, 7
        %v1212 = vsub.s32 0, %v1211
        %v1213 = vrot.slane %v1208, %v1212
        %1215 = vset.pattern.permute.xlu0 0
        %1216 = vperm.xlu0 %1215, %v1118
        %v1217 = vpop.permute.xlu0 %1216
        %v1219 = vlaneseq
        %v1220 = vshrl.u32 %v1219, 7
        %v1221 = vsub.s32 0, %v1220
        %v1222 = vrot.slane %v1217, %v1221
        %v1223 = vmul.f32 %v1159, %v1119
        %v1224 = vmul.f32 %v1159, %v1120
        %v1225 = vmul.f32 %v1168, %v1121
        %v1226 = vmul.f32 %v1168, %v1122
        %v1227 = vmul.f32 %v1177, %v1123
        %v1228 = vmul.f32 %v1177, %v1124
        %v1229 = vmul.f32 %v1186, %v1125
        %v1230 = vmul.f32 %v1186, %v1126
        %v1231 = vmul.f32 %v1195, %v1127
        %v1232 = vmul.f32 %v1195, %v1128
        %v1233 = vmul.f32 %v1204, %v1129
        %v1234 = vmul.f32 %v1204, %v1130
        %v1235 = vmul.f32 %v1213, %v1131
        %v1236 = vmul.f32 %v1213, %v1132
        %v1237 = vmul.f32 %v1222, %v1133
        %v1238 = vmul.f32 %v1222, %v1134
        %v1239 = vmul.f32 %v1159, %v1135
        %v1240 = vmul.f32 %v1159, %v1136
        %v1241 = vmul.f32 %v1168, %v1137
        %v1242 = vmul.f32 %v1168, %v1138
        %v1243 = vmul.f32 %v1177, %v1139
        %v1244 = vmul.f32 %v1177, %v1140
        %v1245 = vmul.f32 %v1186, %v1141
        %v1246 = vmul.f32 %v1186, %v1142
        %v1247 = vmul.f32 %v1195, %v1143
        %v1248 = vmul.f32 %v1195, %v1144
        %v1249 = vmul.f32 %v1204, %v1145
        %v1250 = vmul.f32 %v1204, %v1146
        %v1251 = vmul.f32 %v1213, %v1147
        %v1252 = vmul.f32 %v1213, %v1148
        %v1253 = vmul.f32 %v1222, %v1149
        %v1254 = vmul.f32 %v1222, %v1150
        %1256 = vset.pattern.permute.xlu0 0
        %1257 = vperm.xlu0 %1256, %v1087
        %v1258 = vpop.permute.xlu0 %1257
        %v1260 = vlaneseq
        %v1261 = vshrl.u32 %v1260, 7
        %v1262 = vsub.s32 0, %v1261
        %v1263 = vrot.slane %v1258, %v1262
        %1265 = vset.pattern.permute.xlu0 0
        %1266 = vperm.xlu0 %1265, %v1088
        %v1267 = vpop.permute.xlu0 %1266
        %v1269 = vlaneseq
        %v1270 = vshrl.u32 %v1269, 7
        %v1271 = vsub.s32 0, %v1270
        %v1272 = vrot.slane %v1267, %v1271
        %1274 = vset.pattern.permute.xlu0 0
        %1275 = vperm.xlu0 %1274, %v1089
        %v1276 = vpop.permute.xlu0 %1275
        %v1278 = vlaneseq
        %v1279 = vshrl.u32 %v1278, 7
        %v1280 = vsub.s32 0, %v1279
        %v1281 = vrot.slane %v1276, %v1280
        %1283 = vset.pattern.permute.xlu0 0
        %1284 = vperm.xlu0 %1283, %v1090
        %v1285 = vpop.permute.xlu0 %1284
        %v1287 = vlaneseq
        %v1288 = vshrl.u32 %v1287, 7
        %v1289 = vsub.s32 0, %v1288
        %v1290 = vrot.slane %v1285, %v1289
        %1292 = vset.pattern.permute.xlu0 0
        %1293 = vperm.xlu0 %1292, %v1091
        %v1294 = vpop.permute.xlu0 %1293
        %v1296 = vlaneseq
        %v1297 = vshrl.u32 %v1296, 7
        %v1298 = vsub.s32 0, %v1297
        %v1299 = vrot.slane %v1294, %v1298
        %1301 = vset.pattern.permute.xlu0 0
        %1302 = vperm.xlu0 %1301, %v1092
        %v1303 = vpop.permute.xlu0 %1302
        %v1305 = vlaneseq
        %v1306 = vshrl.u32 %v1305, 7
        %v1307 = vsub.s32 0, %v1306
        %v1308 = vrot.slane %v1303, %v1307
        %1310 = vset.pattern.permute.xlu0 0
        %1311 = vperm.xlu0 %1310, %v1093
        %v1312 = vpop.permute.xlu0 %1311
        %v1314 = vlaneseq
        %v1315 = vshrl.u32 %v1314, 7
        %v1316 = vsub.s32 0, %v1315
        %v1317 = vrot.slane %v1312, %v1316
        %1319 = vset.pattern.permute.xlu0 0
        %1320 = vperm.xlu0 %1319, %v1094
        %v1321 = vpop.permute.xlu0 %1320
        %v1323 = vlaneseq
        %v1324 = vshrl.u32 %v1323, 7
        %v1325 = vsub.s32 0, %v1324
        %v1326 = vrot.slane %v1321, %v1325
        %v1327 = vadd.f32 %v1263, %v1223
        %v1328 = vadd.f32 %v1263, %v1224
        %v1329 = vadd.f32 %v1272, %v1225
        %v1330 = vadd.f32 %v1272, %v1226
        %v1331 = vadd.f32 %v1281, %v1227
        %v1332 = vadd.f32 %v1281, %v1228
        %v1333 = vadd.f32 %v1290, %v1229
        %v1334 = vadd.f32 %v1290, %v1230
        %v1335 = vadd.f32 %v1299, %v1231
        %v1336 = vadd.f32 %v1299, %v1232
        %v1337 = vadd.f32 %v1308, %v1233
        %v1338 = vadd.f32 %v1308, %v1234
        %v1339 = vadd.f32 %v1317, %v1235
        %v1340 = vadd.f32 %v1317, %v1236
        %v1341 = vadd.f32 %v1326, %v1237
        %v1342 = vadd.f32 %v1326, %v1238
        %v1343 = vadd.f32 %v1263, %v1239
        %v1344 = vadd.f32 %v1263, %v1240
        %v1345 = vadd.f32 %v1272, %v1241
        %v1346 = vadd.f32 %v1272, %v1242
        %v1347 = vadd.f32 %v1281, %v1243
        %v1348 = vadd.f32 %v1281, %v1244
        %v1349 = vadd.f32 %v1290, %v1245
        %v1350 = vadd.f32 %v1290, %v1246
        %v1351 = vadd.f32 %v1299, %v1247
        %v1352 = vadd.f32 %v1299, %v1248
        %v1353 = vadd.f32 %v1308, %v1249
        %v1354 = vadd.f32 %v1308, %v1250
        %v1355 = vadd.f32 %v1317, %v1251
        %v1356 = vadd.f32 %v1317, %v1252
        %v1357 = vadd.f32 %v1326, %v1253
        %v1358 = vadd.f32 %v1326, %v1254
        %v1391 = vcombine.low %v1327, %v1328
        %v1392 = vcombine.low %v1329, %v1330
        %v1393 = vcombine.low %v1331, %v1332
        %v1394 = vcombine.low %v1333, %v1334
        %v1395 = vcombine.low %v1335, %v1336
        %v1396 = vcombine.low %v1337, %v1338
        %v1397 = vcombine.low %v1339, %v1340
        %v1398 = vcombine.low %v1341, %v1342
        %v1399 = vcombine.low %v1343, %v1344
        %v1400 = vcombine.low %v1345, %v1346
        %v1401 = vcombine.low %v1347, %v1348
        %v1402 = vcombine.low %v1349, %v1350
        %v1403 = vcombine.low %v1351, %v1352
        %v1404 = vcombine.low %v1353, %v1354
        %v1405 = vcombine.low %v1355, %v1356
        %v1406 = vcombine.low %v1357, %v1358
        %v1423 = vmul.f32 %v302, %v1391
        %v1424 = vmul.f32 %v303, %v1392
        %v1425 = vmul.f32 %v304, %v1393
        %v1426 = vmul.f32 %v305, %v1394
        %v1427 = vmul.f32 %v306, %v1395
        %v1428 = vmul.f32 %v307, %v1396
        %v1429 = vmul.f32 %v308, %v1397
        %v1430 = vmul.f32 %v309, %v1398
        %v1431 = vmul.f32 %v310, %v1399
        %v1432 = vmul.f32 %v311, %v1400
        %v1433 = vmul.f32 %v312, %v1401
        %v1434 = vmul.f32 %v313, %v1402
        %v1435 = vmul.f32 %v314, %v1403
        %v1436 = vmul.f32 %v315, %v1404
        %v1437 = vmul.f32 %v316, %v1405
        %v1438 = vmul.f32 %v317, %v1406
        %1439 = vst [vmem:[%s289] sm:$0x77] %v1423
        %1440 = vst [vmem:[%s289 + $0x8] sm:$0x77] %v1424
        %1441 = vst [vmem:[%s289 + $0x10] sm:$0x77] %v1425
        %1442 = vst [vmem:[%s289 + $0x18] sm:$0x77] %v1426
        %1443 = vst [vmem:[%s289 + $0x20] sm:$0x77] %v1427
        %1444 = vst [vmem:[%s289 + $0x28] sm:$0x77] %v1428
        %1445 = vst [vmem:[%s289 + $0x30] sm:$0x77] %v1429
        %1446 = vst [vmem:[%s289 + $0x38] sm:$0x77] %v1430
        %1447 = vst [vmem:[%s289 + $0x40] sm:$0x77] %v1431
        %1448 = vst [vmem:[%s289 + $0x48] sm:$0x77] %v1432
        %1449 = vst [vmem:[%s289 + $0x50] sm:$0x77] %v1433
        %1450 = vst [vmem:[%s289 + $0x58] sm:$0x77] %v1434
        %1451 = vst [vmem:[%s289 + $0x60] sm:$0x77] %v1435
        %1452 = vst [vmem:[%s289 + $0x68] sm:$0x77] %v1436
        %1453 = vst [vmem:[%s289 + $0x70] sm:$0x77] %v1437
        %1454 = vst [vmem:[%s289 + $0x78] sm:$0x77] %v1438
        %s1455 = sand.u32 %s100, 1
        %s1456 = sand.u32 %s100, 1
        %s1457 = smul.addr %s1456, 128
        %s1458 = scalar_lea.vmem [#allocation3], %s1457
        // Predicated region
        $region71: #{tpu_custom_call.1} parent=65 // pred_check
          %p1459 = pneg %p110
        $region72: #{tpu_custom_call.1} parent=65 // pred_check_branch
          %1461 = sbr.rel (%p1459) target = $region74
        $region73: #{tpu_custom_call.1} parent=65 // pred_region
          %s1462 = smul.u32 8, %s14
          %s1463 = smul.addr %s1462, 2
          %s1464 = smul.addr %s1463, 4
          %s1465 = scalar_lea.vmem %s3, %s1464
          // Predicated region
          $region75: #{tpu_custom_call.1} parent=73 // pred_check
            _
          $region76: #{tpu_custom_call.1} parent=73 // pred_check_branch
            %1467 = sbr.rel (0) target = $region78
          $region77: #{tpu_custom_call.1} parent=73 // pred_region
            // Predicated region
            $region79: #{tpu_custom_call.1} parent=77 // pred_check
              _
            $region80: #{tpu_custom_call.1} parent=77 // pred_check_branch
              %1469 = sbr.rel (0) target = $region82
            $region81: #{tpu_custom_call.1} parent=77 // pred_region
              // Predicated region
              $region94: #{tpu_custom_call.1} parent=81 // pred_check
                _
              $region95: #{tpu_custom_call.1} parent=81 // pred_check_branch
                %1515 = sbr.rel (0) target = $region97
              $region96: #{tpu_custom_call.1} parent=81 // pred_region
                loop: start=0, step=1, limit=1
                $region98: #{tpu_custom_call.1} parent=96 // loop_pre_header
                  _
                $region99: #{tpu_custom_call.1} parent=96 // loop_header
                  %s1517 = sphi 0, %s1521
                  %p1518 = scmp.ge.s32.totalorder %s1517, 1
                  %s1522 = sphi %s1458, %s1458
                  %s1523 = sphi %s1465, %s1465
                $region100: #{tpu_custom_call.1} parent=96 // loop_header_branch
                  %1520 = sbr.rel (%p1518) target = $region104
                $region101: #{tpu_custom_call.1} parent=96 // loop_body
                  %v1524 = vld [vmem:[%s1522] sm:$0xff]
                  %1525 = vst [vmem:[%s1523] sm:$0xff] %v1524
                  %v1526 = vld [vmem:[%s1522 + $0x8] sm:$0xff]
                  %1527 = vst [vmem:[%s1523 + $0x8] sm:$0xff] %v1526
                  %v1528 = vld [vmem:[%s1522 + $0x10] sm:$0xff]
                  %1529 = vst [vmem:[%s1523 + $0x10] sm:$0xff] %v1528
                  %v1530 = vld [vmem:[%s1522 + $0x18] sm:$0xff]
                  %1531 = vst [vmem:[%s1523 + $0x18] sm:$0xff] %v1530
                  %v1532 = vld [vmem:[%s1522 + $0x20] sm:$0xff]
                  %1533 = vst [vmem:[%s1523 + $0x20] sm:$0xff] %v1532
                  %v1534 = vld [vmem:[%s1522 + $0x28] sm:$0xff]
                  %1535 = vst [vmem:[%s1523 + $0x28] sm:$0xff] %v1534
                  %v1536 = vld [vmem:[%s1522 + $0x30] sm:$0xff]
                  %1537 = vst [vmem:[%s1523 + $0x30] sm:$0xff] %v1536
                  %v1538 = vld [vmem:[%s1522 + $0x38] sm:$0xff]
                  %1539 = vst [vmem:[%s1523 + $0x38] sm:$0xff] %v1538
                  %v1540 = vld [vmem:[%s1522 + $0x40] sm:$0xff]
                  %1541 = vst [vmem:[%s1523 + $0x80] sm:$0xff] %v1540
                  %v1542 = vld [vmem:[%s1522 + $0x48] sm:$0xff]
                  %1543 = vst [vmem:[%s1523 + $0x88] sm:$0xff] %v1542
                  %v1544 = vld [vmem:[%s1522 + $0x50] sm:$0xff]
                  %1545 = vst [vmem:[%s1523 + $0x90] sm:$0xff] %v1544
                  %v1546 = vld [vmem:[%s1522 + $0x58] sm:$0xff]
                  %1547 = vst [vmem:[%s1523 + $0x98] sm:$0xff] %v1546
                  %v1548 = vld [vmem:[%s1522 + $0x60] sm:$0xff]
                  %1549 = vst [vmem:[%s1523 + $0xa0] sm:$0xff] %v1548
                  %v1550 = vld [vmem:[%s1522 + $0x68] sm:$0xff]
                  %1551 = vst [vmem:[%s1523 + $0xa8] sm:$0xff] %v1550
                  %v1552 = vld [vmem:[%s1522 + $0x70] sm:$0xff]
                  %1553 = vst [vmem:[%s1523 + $0xb0] sm:$0xff] %v1552
                  %v1554 = vld [vmem:[%s1522 + $0x78] sm:$0xff]
                  %1555 = vst [vmem:[%s1523 + $0xb8] sm:$0xff] %v1554
                $region102: #{tpu_custom_call.1} parent=96 // loop_footer
                  %s1521 = sadd.s32 1, %s1517
                $region103: #{tpu_custom_call.1} parent=96 // loop_footer_branch
                  %1516 = sbr.rel target = $region99
                $region104: #{tpu_custom_call.1} parent=96 // loop_exit
                  _
              $region97: #{tpu_custom_call.1} parent=81 // pred_fallthru
                _
              // Predicated region
              $region105: #{tpu_custom_call.1} parent=81 // pred_check
                _
              $region106: #{tpu_custom_call.1} parent=81 // pred_check_branch
                %1557 = sbr.rel target = $region108
              $region107: #{tpu_custom_call.1} parent=81 // pred_region
                _
              $region108: #{tpu_custom_call.1} parent=81 // pred_fallthru
                _
            $region82: #{tpu_custom_call.1} parent=77 // pred_fallthru
              _
            // Predicated region
            $region83: #{tpu_custom_call.1} parent=77 // pred_check
              _
            $region84: #{tpu_custom_call.1} parent=77 // pred_check_branch
              %1471 = sbr.rel target = $region86
            $region85: #{tpu_custom_call.1} parent=77 // pred_region
              %s1473 = ssub.s32 256, 1
              loop: start=0, step=1, limit=1
              $region87: #{tpu_custom_call.1} parent=85 // loop_pre_header
                _
              $region88: #{tpu_custom_call.1} parent=85 // loop_header
                %s1475 = sphi 0, %s1479
                %p1476 = scmp.ge.s32.totalorder %s1475, 1
                %s1480 = sphi %s1458, %s1458
                %s1481 = sphi %s1465, %s1465
              $region89: #{tpu_custom_call.1} parent=85 // loop_header_branch
                %1478 = sbr.rel (%p1476) target = $region93
              $region90: #{tpu_custom_call.1} parent=85 // loop_body
                %v1482 = vld [vmem:[%s1480] sm:%s1473]
                %1483 = vst [vmem:[%s1481] sm:%s1473] %v1482
                %v1484 = vld [vmem:[%s1480 + $0x8] sm:%s1473]
                %1485 = vst [vmem:[%s1481 + $0x8] sm:%s1473] %v1484
                %v1486 = vld [vmem:[%s1480 + $0x10] sm:%s1473]
                %1487 = vst [vmem:[%s1481 + $0x10] sm:%s1473] %v1486
                %v1488 = vld [vmem:[%s1480 + $0x18] sm:%s1473]
                %1489 = vst [vmem:[%s1481 + $0x18] sm:%s1473] %v1488
                %v1490 = vld [vmem:[%s1480 + $0x20] sm:%s1473]
                %1491 = vst [vmem:[%s1481 + $0x20] sm:%s1473] %v1490
                %v1492 = vld [vmem:[%s1480 + $0x28] sm:%s1473]
                %1493 = vst [vmem:[%s1481 + $0x28] sm:%s1473] %v1492
                %v1494 = vld [vmem:[%s1480 + $0x30] sm:%s1473]
                %1495 = vst [vmem:[%s1481 + $0x30] sm:%s1473] %v1494
                %v1496 = vld [vmem:[%s1480 + $0x38] sm:%s1473]
                %1497 = vst [vmem:[%s1481 + $0x38] sm:%s1473] %v1496
                %v1498 = vld [vmem:[%s1480 + $0x40] sm:%s1473]
                %1499 = vst [vmem:[%s1481 + $0x80] sm:%s1473] %v1498
                %v1500 = vld [vmem:[%s1480 + $0x48] sm:%s1473]
                %1501 = vst [vmem:[%s1481 + $0x88] sm:%s1473] %v1500
                %v1502 = vld [vmem:[%s1480 + $0x50] sm:%s1473]
                %1503 = vst [vmem:[%s1481 + $0x90] sm:%s1473] %v1502
                %v1504 = vld [vmem:[%s1480 + $0x58] sm:%s1473]
                %1505 = vst [vmem:[%s1481 + $0x98] sm:%s1473] %v1504
                %v1506 = vld [vmem:[%s1480 + $0x60] sm:%s1473]
                %1507 = vst [vmem:[%s1481 + $0xa0] sm:%s1473] %v1506
                %v1508 = vld [vmem:[%s1480 + $0x68] sm:%s1473]
                %1509 = vst [vmem:[%s1481 + $0xa8] sm:%s1473] %v1508
                %v1510 = vld [vmem:[%s1480 + $0x70] sm:%s1473]
                %1511 = vst [vmem:[%s1481 + $0xb0] sm:%s1473] %v1510
                %v1512 = vld [vmem:[%s1480 + $0x78] sm:%s1473]
                %1513 = vst [vmem:[%s1481 + $0xb8] sm:%s1473] %v1512
              $region91: #{tpu_custom_call.1} parent=85 // loop_footer
                %s1479 = sadd.s32 1, %s1475
              $region92: #{tpu_custom_call.1} parent=85 // loop_footer_branch
                %1474 = sbr.rel target = $region88
              $region93: #{tpu_custom_call.1} parent=85 // loop_exit
                _
            $region86: #{tpu_custom_call.1} parent=77 // pred_fallthru
              _
          $region78: #{tpu_custom_call.1} parent=73 // pred_fallthru
            _
          %1558 = vnop
        $region74: #{tpu_custom_call.1} parent=65 // pred_fallthru
          _
      $region66: #{tpu_custom_call.1} parent=5 // pred_fallthru
        _
      %p1559 = scmp.le.s32.totalorder 2, %s9
      // Predicated region
      $region109: #{tpu_custom_call.1} parent=5 // pred_check
        %p1560 = pneg %p1559
      $region110: #{tpu_custom_call.1} parent=5 // pred_check_branch
        %1562 = sbr.rel (%p1560) target = $region112
      $region111: #{tpu_custom_call.1} parent=5 // pred_region
        %s1563 = ssub.s32 %s9, 2
        // Predicated region
        $region113: #{tpu_custom_call.1} parent=111 // pred_check
          %p1564 = pneg %p116
        $region114: #{tpu_custom_call.1} parent=111 // pred_check_branch
          %1566 = sbr.rel (%p1564) target = $region116
        $region115: #{tpu_custom_call.1} parent=111 // pred_region
          %s1567 = sand.u32 %s101, 1
          %s1568 = sand.u32 %s101, 1
          %s1569 = smul.addr %s1568, 128
          %s1570 = scalar_lea.vmem [#allocation3], %s1569
        $region116: #{tpu_custom_call.1} parent=111 // pred_fallthru
          _
      $region112: #{tpu_custom_call.1} parent=5 // pred_fallthru
        _
    $region6: #{tpu_custom_call.1} parent=1 // loop_footer
      %s13 = sadd.s32 1, %s9
    $region7: #{tpu_custom_call.1} parent=1 // loop_footer_branch
      %8 = sbr.rel target = $region3
    $region8: #{tpu_custom_call.1} parent=1 // loop_exit
      _

</llo_original>
